<compile_context>
chip_gen: v7x
topology: tpu7x:2x2x1
jax: 0.10.0
libtpu: 0.0.40
codegen_flags: <defaults>
</compile_context>

<pallas_src>
import functools

import jax
import jax.numpy as jnp
from jax.experimental import pallas as pl
from jax.experimental.pallas import tpu as pltpu


# ----------------------------------------------------------------------------- kernels


def neural_loop_kernel(adj_ref, feat_ref, hwt_ref, hb_ref, wwt_ref, wb_ref,
                       uaf_ref, fp_ref, acc_ref):
    """One NeuralLoop step for a (TM,)-row tile; reduction over adjacency column tiles."""
    k = pl.program_id(1)

    @pl.when(k == 0)
    def _():
        acc_ref[...] = jnp.zeros_like(acc_ref)

    # Message passing (aggr='add', self-loops folded into adj).  adj is stored bf16 to
    # halve HBM traffic; cast up in-register and accumulate in f32.
    a = adj_ref[...].astype(jnp.float32)
    acc_ref[...] += jnp.dot(a, feat_ref[...], preferred_element_type=jnp.float32)

    @pl.when(k == pl.num_programs(1) - 1)
    def _():
        v = acc_ref[...]
        # update(): H linear + sigmoid  (weights pre-transposed in the wrapper)
        uaf = jax.nn.sigmoid(
            jnp.dot(v, hwt_ref[...], preferred_element_type=jnp.float32) + hb_ref[...])
        # W linear + softmax over the fingerprint dimension
        logits = jnp.dot(uaf, wwt_ref[...],
                         preferred_element_type=jnp.float32) + wb_ref[...]
        m = jnp.max(logits, axis=-1, keepdims=True)
        e = jnp.exp(logits - m)
        denom = jnp.sum(e, axis=-1, keepdims=True)
        fp = e * pl.reciprocal(denom, approx=True)   # EUP reciprocal (free slot)
        uaf_ref[...] = uaf
        fp_ref[...] = fp


def scatter_add_kernel(batch_ref, fp1_ref, fp2_ref, out_ref, acc_ref):
    """result = one_hot(batch) @ (fp1 + fp2), reduced over node tiles."""
    k = pl.program_id(0)

    @pl.when(k == 0)
    def _():
        acc_ref[...] = jnp.zeros_like(acc_ref)

    fp = fp1_ref[...] + fp2_ref[...]
    acc_ref[...] += jnp.dot(batch_ref[...], fp, preferred_element_type=jnp.float32)

    @pl.when(k == pl.num_programs(0) - 1)
    def _():
        out_ref[...] = acc_ref[...]


# ----------------------------------------------------------------------------- wrapper


_VMEM_LIMIT = 40 * 1024 * 1024  # safe under v7x's 64 MiB physical VMEM


def _round_up(x, m):
    return ((x + m - 1) // m) * m


def _choose_tiles(num_nodes):
    """(n_pad, tm, tk) — tiles sized for the (8,128) constraint and ~40 MiB VMEM."""
    if num_nodes <= 512:
        n_pad = max(128, _round_up(num_nodes, 128))
        return n_pad, n_pad, n_pad
    tm, tk = 256, 512
    n_pad = _round_up(num_nodes, 512)   # lcm(tm, tk)
    return n_pad, tm, tk


def _neural_loop_call(adj, feat, hw_t, hb, ww_t, wb, *, n_pad, tm, tk, F, FP):
    grid = (n_pad // tm, n_pad // tk)
    return pl.pallas_call(
        neural_loop_kernel,
        out_shape=(jax.ShapeDtypeStruct((n_pad, F), jnp.float32),
                   jax.ShapeDtypeStruct((n_pad, FP), jnp.float32)),
        grid_spec=pltpu.PrefetchScalarGridSpec(
            num_scalar_prefetch=0,
            grid=grid,
            in_specs=[
                pl.BlockSpec((tm, tk), lambda i, k: (i, k)),   # adj tile (bf16)
                pl.BlockSpec((tk, F), lambda i, k: (k, 0)),    # node features tile
                pl.BlockSpec((F, F), lambda i, k: (0, 0)),     # H^T  (resident)
                pl.BlockSpec((1, F), lambda i, k: (0, 0)),     # h bias
                pl.BlockSpec((F, FP), lambda i, k: (0, 0)),    # W^T  (resident)
                pl.BlockSpec((1, FP), lambda i, k: (0, 0)),    # w bias
            ],
            out_specs=[
                pl.BlockSpec((tm, F), lambda i, k: (i, 0)),    # updated atom features
                pl.BlockSpec((tm, FP), lambda i, k: (i, 0)),   # updated fingerprint
            ],
            scratch_shapes=[pltpu.VMEM((tm, F), jnp.float32)],
        ),
        compiler_params=pltpu.CompilerParams(
            dimension_semantics=("parallel", "arbitrary"),
            vmem_limit_bytes=_VMEM_LIMIT),
    )(adj, feat, hw_t, hb, ww_t, wb)


def _scatter_add_call(batch_oh, fp1, fp2, *, n_pad, tn, G, FP):
    grid = (n_pad // tn,)
    return pl.pallas_call(
        scatter_add_kernel,
        out_shape=jax.ShapeDtypeStruct((G, FP), jnp.float32),
        grid_spec=pltpu.PrefetchScalarGridSpec(
            num_scalar_prefetch=0,
            grid=grid,
            in_specs=[
                pl.BlockSpec((G, tn), lambda k: (0, k)),
                pl.BlockSpec((tn, FP), lambda k: (k, 0)),
                pl.BlockSpec((tn, FP), lambda k: (k, 0)),
            ],
            out_specs=pl.BlockSpec((G, FP), lambda k: (0, 0)),
            scratch_shapes=[pltpu.VMEM((G, FP), jnp.float32)],
        ),
        compiler_params=pltpu.CompilerParams(
            dimension_semantics=("arbitrary",),
            vmem_limit_bytes=_VMEM_LIMIT),
    )(batch_oh, fp1, fp2)


@functools.partial(jax.jit, static_argnames=("fp_size", "num_graphs"))
def neural_fp(x, edge_index, batch, params, *, fp_size, num_graphs):
    """x: (N, F) float32, edge_index: (2, E) int32, batch: (N,) int32."""
    num_nodes, atom_features = x.shape
    n_pad, tm, tk = _choose_tiles(num_nodes)

    src, dst = edge_index[0], edge_index[1]

    # Dense adjacency padded to n_pad, message j -> i means adj[dst, src] += 1, plus
    # self-loops for the real nodes.  bf16 is exact for small integer counts and halves
    # the HBM traffic of the dominant O(N^2) operand.
    adj = jnp.zeros((n_pad, n_pad), jnp.float32).at[dst, src].add(1.0)
    diag = jnp.arange(num_nodes)
    adj = adj.at[diag, diag].add(1.0)
    adj = adj.astype(jnp.bfloat16)

    x_pad = jnp.zeros((n_pad, atom_features), jnp.float32)
    x_pad = x_pad.at[:num_nodes].set(x.astype(jnp.float32))

    batch_oh = jax.nn.one_hot(batch, num_graphs, dtype=jnp.float32)          # (N, G)
    batch_oh_p = jnp.zeros((num_graphs, n_pad), jnp.float32)
    batch_oh_p = batch_oh_p.at[:, :num_nodes].set(batch_oh.T)                # (G, n_pad)

    (h1w, h1b, w1w, w1b, h2w, h2b, w2w, w2b) = params
    # Pre-transpose weights (no in-kernel transpose); keep biases 2D for TPU layout.
    h1w_t, w1w_t = h1w.T, w1w.T
    h2w_t, w2w_t = h2w.T, w2w.T
    h1b, w1b = h1b.reshape(1, -1), w1b.reshape(1, -1)
    h2b, w2b = h2b.reshape(1, -1), w2b.reshape(1, -1)

    F, FP = atom_features, fp_size
    dims = dict(n_pad=n_pad, tm=tm, tk=tk, F=F, FP=FP)

    uaf1, fp1 = _neural_loop_call(adj, x_pad, h1w_t, h1b, w1w_t, w1b, **dims)
    _, fp2 = _neural_loop_call(adj, uaf1, h2w_t, h2b, w2w_t, w2b, **dims)

    return _scatter_add_call(batch_oh_p, fp1, fp2,
                             n_pad=n_pad, tn=tk, G=num_graphs, FP=FP)


# --------------------------------------------------------------------------- reference


def _init_linear(key, out_features, in_features):
    """Deterministic PyTorch-style init: U(-1/sqrt(fan_in), 1/sqrt(fan_in))."""
    kw, kb = jax.random.split(key)
    bound = 1.0 / (in_features ** 0.5)
    w = jax.random.uniform(kw, (out_features, in_features), jnp.float32, -bound, bound)
    b = jax.random.uniform(kb, (out_features,), jnp.float32, -bound, bound)
    return w, b


def _reference(x, edge_index, batch, params, fp_size, num_graphs):
    """Pure-JAX reference mirroring the PyTorch forward pass."""
    num_nodes = x.shape[0]
    src, dst = edge_index[0], edge_index[1]
    adj = jnp.zeros((num_nodes, num_nodes), jnp.float32).at[dst, src].add(1.0)
    adj = adj + jnp.eye(num_nodes, dtype=jnp.float32)
    (h1w, h1b, w1w, w1b, h2w, h2b, w2w, w2b) = params

    out = x.astype(jnp.float32)
    fingerprint = jnp.zeros((num_nodes, fp_size), jnp.float32)
    for hw, hb, ww, wb in ((h1w, h1b, w1w, w1b), (h2w, h2b, w2w, w2b)):
        v = adj @ out
        uaf = jax.nn.sigmoid(v @ hw.T + hb)
        ufp = jax.nn.softmax(uaf @ ww.T + wb, axis=-1)
        out = uaf
        fingerprint = fingerprint + ufp
    return jnp.zeros((num_graphs, fp_size), jnp.float32).at[batch].add(fingerprint)


# -------------------------------------------------------------------------------- main


if __name__ == "__main__":
    atom_features = 32
    fp_size = 128
    num_nodes = 16
    num_graphs = 2

    key = jax.random.PRNGKey(0)
    kx, ke, k1, k2, k3, k4 = jax.random.split(key, 6)

    # node features (data.x)
    x = jax.random.normal(kx, (num_nodes, atom_features), jnp.float32)

    # random directed edges (no self loops; add_self_loops handles those)
    num_edges = 24
    src = jax.random.randint(ke, (num_edges,), 0, num_nodes, jnp.int32)
    dst = (src + 1 + jax.random.randint(jax.random.fold_in(ke, 1),
                                        (num_edges,), 0, num_nodes - 1,
                                        jnp.int32)) % num_nodes
    edge_index = jnp.stack([src, dst], axis=0)

    # batch assignment: first half of nodes -> graph 0, second half -> graph 1
    batch = jnp.concatenate([jnp.zeros(num_nodes // 2, jnp.int32),
                             jnp.ones(num_nodes - num_nodes // 2, jnp.int32)])

    # deterministic parameters for loop1 / loop2 (H: F->F, W: F->FP)
    h1w, h1b = _init_linear(k1, atom_features, atom_features)
    w1w, w1b = _init_linear(k2, fp_size, atom_features)
    h2w, h2b = _init_linear(k3, atom_features, atom_features)
    w2w, w2b = _init_linear(k4, fp_size, atom_features)
    params = (h1w, h1b, w1w, w1b, h2w, h2b, w2w, w2b)

    out = neural_fp(x, edge_index, batch, params,
                    fp_size=fp_size, num_graphs=num_graphs)
    out = jax.block_until_ready(out)

    ref = _reference(x, edge_index, batch, params, fp_size, num_graphs)
    assert out.shape == (num_graphs, fp_size)
    # Tolerance allows for the approximate EUP reciprocal in the softmax denominator.
    assert jnp.allclose(out, ref, atol=5e-3, rtol=5e-3), "mismatch vs JAX reference"

    print("KERNEL_OK")
</pallas_src>

<mosaic_0001>
module attributes {stable_mosaic.version = 11 : i64} {
  func.func private @main(%arg0: i32) attributes {dimension_semantics = [#tpu.dimension_semantics<core_parallel>], iteration_bounds = array<i64: 2>, tpu.core_type = #tpu.core_type<sc_scalar_subcore>, window_params = []} {
    return
  }
}

module attributes {stable_mosaic.version = 11 : i64} {
  func.func private @main(%arg0: i32) attributes {dimension_semantics = [#tpu.dimension_semantics<core_parallel>], iteration_bounds = array<i64: 2>, tpu.core_type = #tpu.core_type<sc_scalar_subcore>, window_params = []} {
    return
  }
}

module attributes {stable_mosaic.version = 11 : i64} {
  func.func @scatter_add_kernel(%arg0: i32, %arg1: memref<2x128xf32, #tpu.memory_space<vmem>>, %arg2: memref<128x128xf32, #tpu.memory_space<vmem>>, %arg3: memref<128x128xf32, #tpu.memory_space<vmem>>, %arg4: memref<2x128xf32, #tpu.memory_space<vmem>>, %arg5: memref<2x128xf32, #tpu.memory_space<vmem>>) attributes {dimension_semantics = [#tpu.dimension_semantics<arbitrary>], iteration_bounds = array<i64: 1>, scalar_prefetch = 0 : i64, scratch_operands = 1 : i64, tpu.core_type = #tpu.core_type<tc>, window_params = [{transform_indices = @transform_0, window_bounds = array<i64: 2, 128>}, {transform_indices = @transform_1, window_bounds = array<i64: 128, 128>}, {transform_indices = @transform_2, window_bounds = array<i64: 128, 128>}, {pipeline_mode = #tpu.pipeline_mode<synchronous>, transform_indices = @transform_3, window_bounds = array<i64: 2, 128>}]} {
    %c0_i32 = arith.constant 0 : i32
    %0 = arith.cmpi eq, %arg0, %c0_i32 : i32
    %1 = arith.extui %0 : i1 to i32
    %c0_i32_0 = arith.constant 0 : i32
    %2 = arith.cmpi ne, %1, %c0_i32_0 : i32
    scf.if %2 {
      %cst_12 = arith.constant 0.000000e+00 : f32
      %14 = vector.broadcast %cst_12 : f32 to vector<2x128xf32>
      %c0_13 = arith.constant 0 : index
      %c0_14 = arith.constant 0 : index
      %15 = vector.load %arg5[%c0_13, %c0_14] : memref<2x128xf32, #tpu.memory_space<vmem>>, vector<2x128xf32>
      tpu.vector_store %arg5[%c0_13, %c0_14], %14 {strides = array<i32>} : memref<2x128xf32, #tpu.memory_space<vmem>>, vector<2x128xf32>,
    } else {
    }
    %c0 = arith.constant 0 : index
    %c0_1 = arith.constant 0 : index
    %3 = vector.load %arg2[%c0, %c0_1] : memref<128x128xf32, #tpu.memory_space<vmem>>, vector<128x128xf32>
    %c0_2 = arith.constant 0 : index
    %c0_3 = arith.constant 0 : index
    %4 = vector.load %arg3[%c0_2, %c0_3] : memref<128x128xf32, #tpu.memory_space<vmem>>, vector<128x128xf32>
    %5 = arith.addf %3, %4 : vector<128x128xf32>
    %c0_4 = arith.constant 0 : index
    %c0_5 = arith.constant 0 : index
    %6 = vector.load %arg5[%c0_4, %c0_5] : memref<2x128xf32, #tpu.memory_space<vmem>>, vector<2x128xf32>
    %c0_6 = arith.constant 0 : index
    %c0_7 = arith.constant 0 : index
    %7 = vector.load %arg1[%c0_6, %c0_7] : memref<2x128xf32, #tpu.memory_space<vmem>>, vector<2x128xf32>
    %cst = arith.constant dense<0.000000e+00> : vector<2x128xf32>
    %8 = tpu.matmul %7, %5, %cst {dimension_numbers = #tpu.dot_dimension_numbers<[1], [0], [0], [1], [0, 0, 1, 1], [], []>} : vector<2x128xf32>, vector<128x128xf32>, vector<2x128xf32> -> vector<2x128xf32>
    %9 = arith.addf %6, %8 : vector<2x128xf32>
    %c0_8 = arith.constant 0 : index
    %c0_9 = arith.constant 0 : index
    %10 = vector.load %arg5[%c0_8, %c0_9] : memref<2x128xf32, #tpu.memory_space<vmem>>, vector<2x128xf32>
    tpu.vector_store %arg5[%c0_8, %c0_9], %9 {strides = array<i32>} : memref<2x128xf32, #tpu.memory_space<vmem>>, vector<2x128xf32>,
    %c0_i32_10 = arith.constant 0 : i32
    %11 = arith.cmpi eq, %arg0, %c0_i32_10 : i32
    %12 = arith.extui %11 : i1 to i32
    %c0_i32_11 = arith.constant 0 : i32
    %13 = arith.cmpi ne, %12, %c0_i32_11 : i32
    scf.if %13 {
      %c0_12 = arith.constant 0 : index
      %c0_13 = arith.constant 0 : index
      %14 = vector.load %arg5[%c0_12, %c0_13] : memref<2x128xf32, #tpu.memory_space<vmem>>, vector<2x128xf32>
      %c0_14 = arith.constant 0 : index
      %c0_15 = arith.constant 0 : index
      %15 = vector.load %arg4[%c0_14, %c0_15] : memref<2x128xf32, #tpu.memory_space<vmem>>, vector<2x128xf32>
      tpu.vector_store %arg4[%c0_14, %c0_15], %14 {strides = array<i32>} : memref<2x128xf32, #tpu.memory_space<vmem>>, vector<2x128xf32>,
    } else {
    }
    return
  }
  func.func @transform_0(%arg0: i32) -> (i32, i32) {
    %c0_i32 = arith.constant 0 : i32
    %c0_i32_0 = arith.constant 0 : i32
    return %c0_i32, %arg0 : i32, i32
  }
  func.func @transform_1(%arg0: i32) -> (i32, i32) {
    %c0_i32 = arith.constant 0 : i32
    %c0_i32_0 = arith.constant 0 : i32
    return %arg0, %c0_i32 : i32, i32
  }
  func.func @transform_2(%arg0: i32) -> (i32, i32) {
    %c0_i32 = arith.constant 0 : i32
    %c0_i32_0 = arith.constant 0 : i32
    return %arg0, %c0_i32 : i32, i32
  }
  func.func @transform_3(%arg0: i32) -> (i32, i32) {
    %c0_i32 = arith.constant 0 : i32
    %c0_i32_0 = arith.constant 0 : i32
    %c0_i32_1 = arith.constant 0 : i32
    return %c0_i32, %c0_i32_0 : i32, i32
  }
}

module attributes {stable_mosaic.version = 11 : i64} {
  func.func @neural_loop_kernel(%arg0: i32, %arg1: i32, %arg2: memref<128x128xbf16, #tpu.memory_space<vmem>>, %arg3: memref<128x32xf32, #tpu.memory_space<vmem>>, %arg4: memref<32x32xf32, #tpu.memory_space<vmem>>, %arg5: memref<1x32xf32, #tpu.memory_space<vmem>>, %arg6: memref<32x128xf32, #tpu.memory_space<vmem>>, %arg7: memref<1x128xf32, #tpu.memory_space<vmem>>, %arg8: memref<128x32xf32, #tpu.memory_space<vmem>>, %arg9: memref<128x128xf32, #tpu.memory_space<vmem>>, %arg10: memref<128x32xf32, #tpu.memory_space<vmem>>) attributes {dimension_semantics = [#tpu.dimension_semantics<parallel>, #tpu.dimension_semantics<arbitrary>], iteration_bounds = array<i64: 1, 1>, scalar_prefetch = 0 : i64, scratch_operands = 1 : i64, tpu.core_type = #tpu.core_type<tc>, window_params = [{transform_indices = @transform_0, window_bounds = array<i64: 128, 128>}, {transform_indices = @transform_1, window_bounds = array<i64: 128, 32>}, {pipeline_mode = #tpu.pipeline_mode<synchronous>, transform_indices = @transform_2, window_bounds = array<i64: 32, 32>}, {pipeline_mode = #tpu.pipeline_mode<synchronous>, transform_indices = @transform_3, window_bounds = array<i64: 1, 32>}, {pipeline_mode = #tpu.pipeline_mode<synchronous>, transform_indices = @transform_4, window_bounds = array<i64: 32, 128>}, {pipeline_mode = #tpu.pipeline_mode<synchronous>, transform_indices = @transform_5, window_bounds = array<i64: 1, 128>}, {transform_indices = @transform_6, window_bounds = array<i64: 128, 32>}, {transform_indices = @transform_7, window_bounds = array<i64: 128, 128>}]} {
    %c0_i32 = arith.constant 0 : i32
    %0 = arith.cmpi eq, %arg1, %c0_i32 : i32
    %1 = arith.extui %0 : i1 to i32
    %c0_i32_0 = arith.constant 0 : i32
    %2 = arith.cmpi ne, %1, %c0_i32_0 : i32
    scf.if %2 {
      %cst_10 = arith.constant 0.000000e+00 : f32
      %13 = vector.broadcast %cst_10 : f32 to vector<128x32xf32>
      %c0_11 = arith.constant 0 : index
      %c0_12 = arith.constant 0 : index
      %14 = vector.load %arg10[%c0_11, %c0_12] : memref<128x32xf32, #tpu.memory_space<vmem>>, vector<128x32xf32>
      tpu.vector_store %arg10[%c0_11, %c0_12], %13 {strides = array<i32>} : memref<128x32xf32, #tpu.memory_space<vmem>>, vector<128x32xf32>,
    } else {
    }
    %c0 = arith.constant 0 : index
    %c0_1 = arith.constant 0 : index
    %3 = vector.load %arg2[%c0, %c0_1] : memref<128x128xbf16, #tpu.memory_space<vmem>>, vector<128x128xbf16>
    %4 = arith.extf %3 : vector<128x128xbf16> to vector<128x128xf32>
    %c0_2 = arith.constant 0 : index
    %c0_3 = arith.constant 0 : index
    %5 = vector.load %arg10[%c0_2, %c0_3] : memref<128x32xf32, #tpu.memory_space<vmem>>, vector<128x32xf32>
    %c0_4 = arith.constant 0 : index
    %c0_5 = arith.constant 0 : index
    %6 = vector.load %arg3[%c0_4, %c0_5] : memref<128x32xf32, #tpu.memory_space<vmem>>, vector<128x32xf32>
    %cst = arith.constant dense<0.000000e+00> : vector<128x32xf32>
    %7 = tpu.matmul %4, %6, %cst {dimension_numbers = #tpu.dot_dimension_numbers<[1], [0], [0], [1], [0, 0, 1, 1], [], []>} : vector<128x128xf32>, vector<128x32xf32>, vector<128x32xf32> -> vector<128x32xf32>
    %8 = arith.addf %5, %7 : vector<128x32xf32>
    %c0_6 = arith.constant 0 : index
    %c0_7 = arith.constant 0 : index
    %9 = vector.load %arg10[%c0_6, %c0_7] : memref<128x32xf32, #tpu.memory_space<vmem>>, vector<128x32xf32>
    tpu.vector_store %arg10[%c0_6, %c0_7], %8 {strides = array<i32>} : memref<128x32xf32, #tpu.memory_space<vmem>>, vector<128x32xf32>,
    %c0_i32_8 = arith.constant 0 : i32
    %10 = arith.cmpi eq, %arg1, %c0_i32_8 : i32
    %11 = arith.extui %10 : i1 to i32
    %c0_i32_9 = arith.constant 0 : i32
    %12 = arith.cmpi ne, %11, %c0_i32_9 : i32
    scf.if %12 {
      %c0_10 = arith.constant 0 : index
      %c0_11 = arith.constant 0 : index
      %13 = vector.load %arg10[%c0_10, %c0_11] : memref<128x32xf32, #tpu.memory_space<vmem>>, vector<128x32xf32>
      %c0_12 = arith.constant 0 : index
      %c0_13 = arith.constant 0 : index
      %14 = vector.load %arg4[%c0_12, %c0_13] : memref<32x32xf32, #tpu.memory_space<vmem>>, vector<32x32xf32>
      %cst_14 = arith.constant dense<0.000000e+00> : vector<128x32xf32>
      %15 = tpu.matmul %13, %14, %cst_14 {dimension_numbers = #tpu.dot_dimension_numbers<[1], [0], [0], [1], [0, 0, 1, 1], [], []>} : vector<128x32xf32>, vector<32x32xf32>, vector<128x32xf32> -> vector<128x32xf32>
      %c0_15 = arith.constant 0 : index
      %c0_16 = arith.constant 0 : index
      %16 = vector.load %arg5[%c0_15, %c0_16] : memref<1x32xf32, #tpu.memory_space<vmem>>, vector<1x32xf32>
      %17 = vector.broadcast %16 : vector<1x32xf32> to vector<128x32xf32>
      %18 = arith.addf %15, %17 : vector<128x32xf32>
      %19 = arith.negf %18 : vector<128x32xf32>
      %20 = math.exp %19 : vector<128x32xf32>
      %cst_17 = arith.constant 1.000000e+00 : f32
      %21 = vector.broadcast %cst_17 : f32 to vector<128x32xf32>
      %22 = arith.addf %21, %20 : vector<128x32xf32>
      %23 = arith.divf %21, %22 : vector<128x32xf32>
      %c0_18 = arith.constant 0 : index
      %c0_19 = arith.constant 0 : index
      %24 = vector.load %arg6[%c0_18, %c0_19] : memref<32x128xf32, #tpu.memory_space<vmem>>, vector<32x128xf32>
      %cst_20 = arith.constant dense<0.000000e+00> : vector<128x128xf32>
      %25 = tpu.matmul %23, %24, %cst_20 {dimension_numbers = #tpu.dot_dimension_numbers<[1], [0], [0], [1], [0, 0, 1, 1], [], []>} : vector<128x32xf32>, vector<32x128xf32>, vector<128x128xf32> -> vector<128x128xf32>
      %c0_21 = arith.constant 0 : index
      %c0_22 = arith.constant 0 : index
      %26 = vector.load %arg7[%c0_21, %c0_22] : memref<1x128xf32, #tpu.memory_space<vmem>>, vector<1x128xf32>
      %27 = vector.broadcast %26 : vector<1x128xf32> to vector<128x128xf32>
      %28 = arith.addf %25, %27 : vector<128x128xf32>
      %cst_23 = arith.constant dense<0xFF800000> : vector<128xf32>
      %29 = vector.multi_reduction <maximumf>, %28, %cst_23 [1] : vector<128x128xf32> to vector<128xf32>
      %30 = vector.shape_cast %29 : vector<128xf32> to vector<128x1xf32>
      %31 = vector.broadcast %30 : vector<128x1xf32> to vector<128x128xf32>
      %32 = arith.subf %28, %31 : vector<128x128xf32>
      %33 = math.exp %32 : vector<128x128xf32>
      %cst_24 = arith.constant dense<0.000000e+00> : vector<128xf32>
      %34 = vector.multi_reduction <add>, %33, %cst_24 [1] : vector<128x128xf32> to vector<128xf32>
      %35 = vector.shape_cast %34 : vector<128xf32> to vector<128x1xf32>
      %36 = tpu.reciprocal %35 {approx = true} : vector<128x1xf32> -> vector<128x1xf32>
      %37 = vector.broadcast %36 : vector<128x1xf32> to vector<128x128xf32>
      %38 = arith.mulf %33, %37 : vector<128x128xf32>
      %c0_25 = arith.constant 0 : index
      %c0_26 = arith.constant 0 : index
      %39 = vector.load %arg8[%c0_25, %c0_26] : memref<128x32xf32, #tpu.memory_space<vmem>>, vector<128x32xf32>
      tpu.vector_store %arg8[%c0_25, %c0_26], %23 {strides = array<i32>} : memref<128x32xf32, #tpu.memory_space<vmem>>, vector<128x32xf32>,
      %c0_27 = arith.constant 0 : index
      %c0_28 = arith.constant 0 : index
      %40 = vector.load %arg9[%c0_27, %c0_28] : memref<128x128xf32, #tpu.memory_space<vmem>>, vector<128x128xf32>
      tpu.vector_store %arg9[%c0_27, %c0_28], %38 {strides = array<i32>} : memref<128x128xf32, #tpu.memory_space<vmem>>, vector<128x128xf32>,
    } else {
    }
    return
  }
  func.func @transform_0(%arg0: i32, %arg1: i32) -> (i32, i32) {
    %c0_i32 = arith.constant 0 : i32
    return %arg0, %arg1 : i32, i32
  }
  func.func @transform_1(%arg0: i32, %arg1: i32) -> (i32, i32) {
    %c0_i32 = arith.constant 0 : i32
    %c0_i32_0 = arith.constant 0 : i32
    return %arg1, %c0_i32 : i32, i32
  }
  func.func @transform_2(%arg0: i32, %arg1: i32) -> (i32, i32) {
    %c0_i32 = arith.constant 0 : i32
    %c0_i32_0 = arith.constant 0 : i32
    %c0_i32_1 = arith.constant 0 : i32
    return %c0_i32, %c0_i32_0 : i32, i32
  }
  func.func @transform_3(%arg0: i32, %arg1: i32) -> (i32, i32) {
    %c0_i32 = arith.constant 0 : i32
    %c0_i32_0 = arith.constant 0 : i32
    %c0_i32_1 = arith.constant 0 : i32
    return %c0_i32, %c0_i32_0 : i32, i32
  }
  func.func @transform_4(%arg0: i32, %arg1: i32) -> (i32, i32) {
    %c0_i32 = arith.constant 0 : i32
    %c0_i32_0 = arith.constant 0 : i32
    %c0_i32_1 = arith.constant 0 : i32
    return %c0_i32, %c0_i32_0 : i32, i32
  }
  func.func @transform_5(%arg0: i32, %arg1: i32) -> (i32, i32) {
    %c0_i32 = arith.constant 0 : i32
    %c0_i32_0 = arith.constant 0 : i32
    %c0_i32_1 = arith.constant 0 : i32
    return %c0_i32, %c0_i32_0 : i32, i32
  }
  func.func @transform_6(%arg0: i32, %arg1: i32) -> (i32, i32) {
    %c0_i32 = arith.constant 0 : i32
    %c0_i32_0 = arith.constant 0 : i32
    return %arg0, %c0_i32 : i32, i32
  }
  func.func @transform_7(%arg0: i32, %arg1: i32) -> (i32, i32) {
    %c0_i32 = arith.constant 0 : i32
    %c0_i32_0 = arith.constant 0 : i32
    return %arg0, %c0_i32 : i32, i32
  }
}

module attributes {stable_mosaic.version = 11 : i64} {
  func.func @neural_loop_kernel(%arg0: i32, %arg1: i32, %arg2: memref<128x128xbf16, #tpu.memory_space<vmem>>, %arg3: memref<128x32xf32, #tpu.memory_space<vmem>>, %arg4: memref<32x32xf32, #tpu.memory_space<vmem>>, %arg5: memref<1x32xf32, #tpu.memory_space<vmem>>, %arg6: memref<32x128xf32, #tpu.memory_space<vmem>>, %arg7: memref<1x128xf32, #tpu.memory_space<vmem>>, %arg8: memref<128x32xf32, #tpu.memory_space<vmem>>, %arg9: memref<128x128xf32, #tpu.memory_space<vmem>>, %arg10: memref<128x32xf32, #tpu.memory_space<vmem>>) attributes {dimension_semantics = [#tpu.dimension_semantics<parallel>, #tpu.dimension_semantics<arbitrary>], iteration_bounds = array<i64: 1, 1>, scalar_prefetch = 0 : i64, scratch_operands = 1 : i64, tpu.core_type = #tpu.core_type<tc>, window_params = [{transform_indices = @transform_0, window_bounds = array<i64: 128, 128>}, {transform_indices = @transform_1, window_bounds = array<i64: 128, 32>}, {pipeline_mode = #tpu.pipeline_mode<synchronous>, transform_indices = @transform_2, window_bounds = array<i64: 32, 32>}, {pipeline_mode = #tpu.pipeline_mode<synchronous>, transform_indices = @transform_3, window_bounds = array<i64: 1, 32>}, {pipeline_mode = #tpu.pipeline_mode<synchronous>, transform_indices = @transform_4, window_bounds = array<i64: 32, 128>}, {pipeline_mode = #tpu.pipeline_mode<synchronous>, transform_indices = @transform_5, window_bounds = array<i64: 1, 128>}, {transform_indices = @transform_6, window_bounds = array<i64: 128, 32>}, {transform_indices = @transform_7, window_bounds = array<i64: 128, 128>}]} {
    %c0_i32 = arith.constant 0 : i32
    %0 = arith.cmpi eq, %arg1, %c0_i32 : i32
    %1 = arith.extui %0 : i1 to i32
    %c0_i32_0 = arith.constant 0 : i32
    %2 = arith.cmpi ne, %1, %c0_i32_0 : i32
    scf.if %2 {
      %cst_10 = arith.constant 0.000000e+00 : f32
      %13 = vector.broadcast %cst_10 : f32 to vector<128x32xf32>
      %c0_11 = arith.constant 0 : index
      %c0_12 = arith.constant 0 : index
      %14 = vector.load %arg10[%c0_11, %c0_12] : memref<128x32xf32, #tpu.memory_space<vmem>>, vector<128x32xf32>
      tpu.vector_store %arg10[%c0_11, %c0_12], %13 {strides = array<i32>} : memref<128x32xf32, #tpu.memory_space<vmem>>, vector<128x32xf32>,
    } else {
    }
    %c0 = arith.constant 0 : index
    %c0_1 = arith.constant 0 : index
    %3 = vector.load %arg2[%c0, %c0_1] : memref<128x128xbf16, #tpu.memory_space<vmem>>, vector<128x128xbf16>
    %4 = arith.extf %3 : vector<128x128xbf16> to vector<128x128xf32>
    %c0_2 = arith.constant 0 : index
    %c0_3 = arith.constant 0 : index
    %5 = vector.load %arg10[%c0_2, %c0_3] : memref<128x32xf32, #tpu.memory_space<vmem>>, vector<128x32xf32>
    %c0_4 = arith.constant 0 : index
    %c0_5 = arith.constant 0 : index
    %6 = vector.load %arg3[%c0_4, %c0_5] : memref<128x32xf32, #tpu.memory_space<vmem>>, vector<128x32xf32>
    %cst = arith.constant dense<0.000000e+00> : vector<128x32xf32>
    %7 = tpu.matmul %4, %6, %cst {dimension_numbers = #tpu.dot_dimension_numbers<[1], [0], [0], [1], [0, 0, 1, 1], [], []>} : vector<128x128xf32>, vector<128x32xf32>, vector<128x32xf32> -> vector<128x32xf32>
    %8 = arith.addf %5, %7 : vector<128x32xf32>
    %c0_6 = arith.constant 0 : index
    %c0_7 = arith.constant 0 : index
    %9 = vector.load %arg10[%c0_6, %c0_7] : memref<128x32xf32, #tpu.memory_space<vmem>>, vector<128x32xf32>
    tpu.vector_store %arg10[%c0_6, %c0_7], %8 {strides = array<i32>} : memref<128x32xf32, #tpu.memory_space<vmem>>, vector<128x32xf32>,
    %c0_i32_8 = arith.constant 0 : i32
    %10 = arith.cmpi eq, %arg1, %c0_i32_8 : i32
    %11 = arith.extui %10 : i1 to i32
    %c0_i32_9 = arith.constant 0 : i32
    %12 = arith.cmpi ne, %11, %c0_i32_9 : i32
    scf.if %12 {
      %c0_10 = arith.constant 0 : index
      %c0_11 = arith.constant 0 : index
      %13 = vector.load %arg10[%c0_10, %c0_11] : memref<128x32xf32, #tpu.memory_space<vmem>>, vector<128x32xf32>
      %c0_12 = arith.constant 0 : index
      %c0_13 = arith.constant 0 : index
      %14 = vector.load %arg4[%c0_12, %c0_13] : memref<32x32xf32, #tpu.memory_space<vmem>>, vector<32x32xf32>
      %cst_14 = arith.constant dense<0.000000e+00> : vector<128x32xf32>
      %15 = tpu.matmul %13, %14, %cst_14 {dimension_numbers = #tpu.dot_dimension_numbers<[1], [0], [0], [1], [0, 0, 1, 1], [], []>} : vector<128x32xf32>, vector<32x32xf32>, vector<128x32xf32> -> vector<128x32xf32>
      %c0_15 = arith.constant 0 : index
      %c0_16 = arith.constant 0 : index
      %16 = vector.load %arg5[%c0_15, %c0_16] : memref<1x32xf32, #tpu.memory_space<vmem>>, vector<1x32xf32>
      %17 = vector.broadcast %16 : vector<1x32xf32> to vector<128x32xf32>
      %18 = arith.addf %15, %17 : vector<128x32xf32>
      %19 = arith.negf %18 : vector<128x32xf32>
      %20 = math.exp %19 : vector<128x32xf32>
      %cst_17 = arith.constant 1.000000e+00 : f32
      %21 = vector.broadcast %cst_17 : f32 to vector<128x32xf32>
      %22 = arith.addf %21, %20 : vector<128x32xf32>
      %23 = arith.divf %21, %22 : vector<128x32xf32>
      %c0_18 = arith.constant 0 : index
      %c0_19 = arith.constant 0 : index
      %24 = vector.load %arg6[%c0_18, %c0_19] : memref<32x128xf32, #tpu.memory_space<vmem>>, vector<32x128xf32>
      %cst_20 = arith.constant dense<0.000000e+00> : vector<128x128xf32>
      %25 = tpu.matmul %23, %24, %cst_20 {dimension_numbers = #tpu.dot_dimension_numbers<[1], [0], [0], [1], [0, 0, 1, 1], [], []>} : vector<128x32xf32>, vector<32x128xf32>, vector<128x128xf32> -> vector<128x128xf32>
      %c0_21 = arith.constant 0 : index
      %c0_22 = arith.constant 0 : index
      %26 = vector.load %arg7[%c0_21, %c0_22] : memref<1x128xf32, #tpu.memory_space<vmem>>, vector<1x128xf32>
      %27 = vector.broadcast %26 : vector<1x128xf32> to vector<128x128xf32>
      %28 = arith.addf %25, %27 : vector<128x128xf32>
      %cst_23 = arith.constant dense<0xFF800000> : vector<128xf32>
      %29 = vector.multi_reduction <maximumf>, %28, %cst_23 [1] : vector<128x128xf32> to vector<128xf32>
      %30 = vector.shape_cast %29 : vector<128xf32> to vector<128x1xf32>
      %31 = vector.broadcast %30 : vector<128x1xf32> to vector<128x128xf32>
      %32 = arith.subf %28, %31 : vector<128x128xf32>
      %33 = math.exp %32 : vector<128x128xf32>
      %cst_24 = arith.constant dense<0.000000e+00> : vector<128xf32>
      %34 = vector.multi_reduction <add>, %33, %cst_24 [1] : vector<128x128xf32> to vector<128xf32>
      %35 = vector.shape_cast %34 : vector<128xf32> to vector<128x1xf32>
      %36 = tpu.reciprocal %35 {approx = true} : vector<128x1xf32> -> vector<128x1xf32>
      %37 = vector.broadcast %36 : vector<128x1xf32> to vector<128x128xf32>
      %38 = arith.mulf %33, %37 : vector<128x128xf32>
      %c0_25 = arith.constant 0 : index
      %c0_26 = arith.constant 0 : index
      %39 = vector.load %arg8[%c0_25, %c0_26] : memref<128x32xf32, #tpu.memory_space<vmem>>, vector<128x32xf32>
      tpu.vector_store %arg8[%c0_25, %c0_26], %23 {strides = array<i32>} : memref<128x32xf32, #tpu.memory_space<vmem>>, vector<128x32xf32>,
      %c0_27 = arith.constant 0 : index
      %c0_28 = arith.constant 0 : index
      %40 = vector.load %arg9[%c0_27, %c0_28] : memref<128x128xf32, #tpu.memory_space<vmem>>, vector<128x128xf32>
      tpu.vector_store %arg9[%c0_27, %c0_28], %38 {strides = array<i32>} : memref<128x128xf32, #tpu.memory_space<vmem>>, vector<128x128xf32>,
    } else {
    }
    return
  }
  func.func @transform_0(%arg0: i32, %arg1: i32) -> (i32, i32) {
    %c0_i32 = arith.constant 0 : i32
    return %arg0, %arg1 : i32, i32
  }
  func.func @transform_1(%arg0: i32, %arg1: i32) -> (i32, i32) {
    %c0_i32 = arith.constant 0 : i32
    %c0_i32_0 = arith.constant 0 : i32
    return %arg1, %c0_i32 : i32, i32
  }
  func.func @transform_2(%arg0: i32, %arg1: i32) -> (i32, i32) {
    %c0_i32 = arith.constant 0 : i32
    %c0_i32_0 = arith.constant 0 : i32
    %c0_i32_1 = arith.constant 0 : i32
    return %c0_i32, %c0_i32_0 : i32, i32
  }
  func.func @transform_3(%arg0: i32, %arg1: i32) -> (i32, i32) {
    %c0_i32 = arith.constant 0 : i32
    %c0_i32_0 = arith.constant 0 : i32
    %c0_i32_1 = arith.constant 0 : i32
    return %c0_i32, %c0_i32_0 : i32, i32
  }
  func.func @transform_4(%arg0: i32, %arg1: i32) -> (i32, i32) {
    %c0_i32 = arith.constant 0 : i32
    %c0_i32_0 = arith.constant 0 : i32
    %c0_i32_1 = arith.constant 0 : i32
    return %c0_i32, %c0_i32_0 : i32, i32
  }
  func.func @transform_5(%arg0: i32, %arg1: i32) -> (i32, i32) {
    %c0_i32 = arith.constant 0 : i32
    %c0_i32_0 = arith.constant 0 : i32
    %c0_i32_1 = arith.constant 0 : i32
    return %c0_i32, %c0_i32_0 : i32, i32
  }
  func.func @transform_6(%arg0: i32, %arg1: i32) -> (i32, i32) {
    %c0_i32 = arith.constant 0 : i32
    %c0_i32_0 = arith.constant 0 : i32
    return %arg0, %c0_i32 : i32, i32
  }
  func.func @transform_7(%arg0: i32, %arg1: i32) -> (i32, i32) {
    %c0_i32 = arith.constant 0 : i32
    %c0_i32_0 = arith.constant 0 : i32
    return %arg0, %c0_i32 : i32, i32
  }
}

</mosaic_0001>

<llo_original>
// kernel: neural_fp.5
$region0: #{neural_fp.5}
  #allocation0 [shape = 'u32[]', space=smem, size = 0x4, offset = 0x4, fixed_abs, tag = 'smem constant byte address 0x4 - core index']
  #allocation1 [shape = 'u32[144,128]{1,0:T(1,128)}', space=vmem, size = 0x12000, scoped, tag = 'internal scratch']
  #allocation2 [shape = 'f32[2,128]{1,0:T(2,128)}', space=vmem, size = 0x400, scoped, tag = 'scratch operand']
  %s0 = inlined_call_operand.vmem [shape: f32[2,128], index: 0, kind: input, shape index: {}]
  %s1 = inlined_call_operand.vmem [shape: f32[128,128], index: 1, kind: input, shape index: {}]
  %s2 = inlined_call_operand.vmem [shape: f32[128,128], index: 2, kind: input, shape index: {}]
  %s3 = inlined_call_operand.hbm [shape: f32[2,128], index: 3, kind: output, shape index: {}]
  %s4 = sld [smem:[#allocation0]]
  $region30: #{neural_fp.5} parent=0
    _
  %s6 = ssub.s32 1, %s4
  %s7 = scalar_select 0, %s6, %s4
  $region1: #{neural_fp.5} parent=0
    #allocation3 [shape = 'u8[1024]{0}', space=vmem, size = 0x400, scoped, tag = 'output window, operand 0, single buffered']
    #allocation4 [shape = 's32[1]{0}', space=sflag, size = 0x4, scoped, tag = 'scoped memory for neural_fp.5']
    %8 = vsyncpa [#allocation4], 0
    // Predicated region
    $region2: #{neural_fp.5} parent=1 // pred_check
      _
    $region3: #{neural_fp.5} parent=1 // pred_check_branch
      %10 = sbr.rel (0) target = $region5
    $region4: #{neural_fp.5} parent=1 // pred_region
      _
    $region5: #{neural_fp.5} parent=1 // pred_fallthru
      _
    // Predicated region
    $region6: #{neural_fp.5} parent=1 // pred_check
      _
    $region7: #{neural_fp.5} parent=1 // pred_check_branch
      %12 = sbr.rel (0) target = $region9
    $region8: #{neural_fp.5} parent=1 // pred_region
      _
    $region9: #{neural_fp.5} parent=1 // pred_fallthru
      _
    // Predicated region
    $region10: #{neural_fp.5} parent=1 // pred_check
      _
    $region11: #{neural_fp.5} parent=1 // pred_check_branch
      %14 = sbr.rel (0) target = $region13
    $region12: #{neural_fp.5} parent=1 // pred_region
      _
    $region13: #{neural_fp.5} parent=1 // pred_fallthru
      _
    %p15 = scmp.eq.s32.totalorder 0, 0
    // Predicated region
    $region14: #{neural_fp.5} parent=1 // pred_check
      %p16 = pneg %p15
    $region15: #{neural_fp.5} parent=1 // pred_check_branch
      %18 = sbr.rel (%p16) target = $region17
    $region16: #{neural_fp.5} parent=1 // pred_region
      %19 = vst [vmem:[#allocation2] sm:$0x3] 0.0
    $region17: #{neural_fp.5} parent=1 // pred_fallthru
      _
    %v20 = vld [vmem:[%s1] sm:$0xff]
    %v21 = vld [vmem:[%s1 + $0x8] sm:$0xff]
    %v22 = vld [vmem:[%s1 + $0x10] sm:$0xff]
    %v23 = vld [vmem:[%s1 + $0x18] sm:$0xff]
    %v24 = vld [vmem:[%s1 + $0x20] sm:$0xff]
    %v25 = vld [vmem:[%s1 + $0x28] sm:$0xff]
    %v26 = vld [vmem:[%s1 + $0x30] sm:$0xff]
    %v27 = vld [vmem:[%s1 + $0x38] sm:$0xff]
    %v28 = vld [vmem:[%s1 + $0x40] sm:$0xff]
    %v29 = vld [vmem:[%s1 + $0x48] sm:$0xff]
    %v30 = vld [vmem:[%s1 + $0x50] sm:$0xff]
    %v31 = vld [vmem:[%s1 + $0x58] sm:$0xff]
    %v32 = vld [vmem:[%s1 + $0x60] sm:$0xff]
    %v33 = vld [vmem:[%s1 + $0x68] sm:$0xff]
    %v34 = vld [vmem:[%s1 + $0x70] sm:$0xff]
    %v35 = vld [vmem:[%s1 + $0x78] sm:$0xff]
    %v36 = vld [vmem:[%s2] sm:$0xff]
    %v37 = vld [vmem:[%s2 + $0x8] sm:$0xff]
    %v38 = vld [vmem:[%s2 + $0x10] sm:$0xff]
    %v39 = vld [vmem:[%s2 + $0x18] sm:$0xff]
    %v40 = vld [vmem:[%s2 + $0x20] sm:$0xff]
    %v41 = vld [vmem:[%s2 + $0x28] sm:$0xff]
    %v42 = vld [vmem:[%s2 + $0x30] sm:$0xff]
    %v43 = vld [vmem:[%s2 + $0x38] sm:$0xff]
    %v44 = vld [vmem:[%s2 + $0x40] sm:$0xff]
    %v45 = vld [vmem:[%s2 + $0x48] sm:$0xff]
    %v46 = vld [vmem:[%s2 + $0x50] sm:$0xff]
    %v47 = vld [vmem:[%s2 + $0x58] sm:$0xff]
    %v48 = vld [vmem:[%s2 + $0x60] sm:$0xff]
    %v49 = vld [vmem:[%s2 + $0x68] sm:$0xff]
    %v50 = vld [vmem:[%s2 + $0x70] sm:$0xff]
    %v51 = vld [vmem:[%s2 + $0x78] sm:$0xff]
    %v52 = vadd.f32 %v20, %v36
    %v53 = vadd.f32 %v21, %v37
    %v54 = vadd.f32 %v22, %v38
    %v55 = vadd.f32 %v23, %v39
    %v56 = vadd.f32 %v24, %v40
    %v57 = vadd.f32 %v25, %v41
    %v58 = vadd.f32 %v26, %v42
    %v59 = vadd.f32 %v27, %v43
    %v60 = vadd.f32 %v28, %v44
    %v61 = vadd.f32 %v29, %v45
    %v62 = vadd.f32 %v30, %v46
    %v63 = vadd.f32 %v31, %v47
    %v64 = vadd.f32 %v32, %v48
    %v65 = vadd.f32 %v33, %v49
    %v66 = vadd.f32 %v34, %v50
    %v67 = vadd.f32 %v35, %v51
    %v68 = vld [vmem:[#allocation2] sm:$0x3]
    %v69 = vld [vmem:[%s0] sm:$0x3]
    %70 = vmatprep.subr.mxu0 0.0
    %71 = vmatpush1.msra.mxu0 %v52
    %72 = vmatprep.subr.mxu0 0.0
    %73 = vmatpush1.msra.mxu0 %v53
    %74 = vmatprep.subr.mxu0 0.0
    %75 = vmatpush1.msra.mxu0 %v54
    %76 = vmatprep.subr.mxu0 0.0
    %77 = vmatpush1.msra.mxu0 %v55
    %78 = vmatprep.subr.mxu0 0.0
    %79 = vmatpush1.msra.mxu0 %v56
    %80 = vmatprep.subr.mxu0 0.0
    %81 = vmatpush1.msra.mxu0 %v57
    %82 = vmatprep.subr.mxu0 0.0
    %83 = vmatpush1.msra.mxu0 %v58
    %84 = vmatprep.subr.mxu0 0.0
    %85 = vmatpush1.msra.mxu0 %v59
    %86 = vmatprep.subr.mxu0 0.0
    %87 = vmatpush1.msra.mxu0 %v60
    %88 = vmatprep.subr.mxu0 0.0
    %89 = vmatpush1.msra.mxu0 %v61
    %90 = vmatprep.subr.mxu0 0.0
    %91 = vmatpush1.msra.mxu0 %v62
    %92 = vmatprep.subr.mxu0 0.0
    %93 = vmatpush1.msra.mxu0 %v63
    %94 = vmatprep.subr.mxu0 0.0
    %95 = vmatpush1.msra.mxu0 %v64
    %96 = vmatprep.subr.mxu0 0.0
    %97 = vmatpush1.msra.mxu0 %v65
    %98 = vmatprep.subr.mxu0 0.0
    %99 = vmatpush1.msra.mxu0 %v66
    %100 = vmatprep.subr.mxu0 0.0
    %101 = vmatpush1.msra.mxu0 %v67
    %102 = vmatprep.subr.mxu0 0.0
    %103 = vmatpush1.msra.mxu0 0.0
    %104 = vmatprep.subr.mxu0 0.0
    %105 = vmatpush1.msra.mxu0 0.0
    %106 = vmatprep.subr.mxu0 0.0
    %107 = vmatpush1.msra.mxu0 0.0
    %108 = vmatprep.subr.mxu0 0.0
    %109 = vmatpush1.msra.mxu0 0.0
    %110 = vmatprep.subr.mxu0 0.0
    %111 = vmatpush1.msra.mxu0 0.0
    %112 = vmatprep.subr.mxu0 0.0
    %113 = vmatpush1.msra.mxu0 0.0
    %114 = vmatprep.subr.mxu0 0.0
    %115 = vmatpush1.msra.mxu0 0.0
    %116 = vmatprep.subr.mxu0 0.0
    %117 = vmatpush1.msra.mxu0 0.0
    %118 = vmatprep.subr.mxu0 0.0
    %119 = vmatpush1.msra.mxu0 0.0
    %120 = vmatprep.subr.mxu0 0.0
    %121 = vmatpush1.msra.mxu0 0.0
    %122 = vmatprep.subr.mxu0 0.0
    %123 = vmatpush1.msra.mxu0 0.0
    %124 = vmatprep.subr.mxu0 0.0
    %125 = vmatpush1.msra.mxu0 0.0
    %126 = vmatprep.subr.mxu0 0.0
    %127 = vmatpush1.msra.mxu0 0.0
    %128 = vmatprep.subr.mxu0 0.0
    %129 = vmatpush1.msra.mxu0 0.0
    %130 = vmatprep.subr.mxu0 0.0
    %131 = vmatpush1.msra.mxu0 0.0
    %132 = vmatprep.subr.mxu0 0.0
    %133 = vmatpush1.msra.mxu0 0.0
    %134 = vmatprep.mubr.f32.mxu0 0.0
    %135 = vmatmul.mubr.f32.gmra.mrb[0].mxu0 %v69
    %v136 = vpop.f32.mrb[0].mxu0
    %v137 = vadd.f32 0.0, %v136
    %v138 = vpop.f32.mrb[0].mxu0
    %139 = vdwg.mxu0
    %v140 = vadd.f32 %v68, %v137
    %141 = vst [vmem:[#allocation2] sm:$0x3] %v140
    // Predicated region
    $region18: #{neural_fp.5} parent=1 // pred_check
      %p142 = pneg %p15
    $region19: #{neural_fp.5} parent=1 // pred_check_branch
      %144 = sbr.rel (%p142) target = $region21
    $region20: #{neural_fp.5} parent=1 // pred_region
      %v145 = vld [vmem:[#allocation2] sm:$0x3]
      %146 = vst [vmem:[#allocation3] sm:$0x3] %v145
    $region21: #{neural_fp.5} parent=1 // pred_fallthru
      _
    // Predicated region
    $region22: #{neural_fp.5} parent=1 // pred_check
      _
    $region23: #{neural_fp.5} parent=1 // pred_check_branch
      %148 = sbr.rel (0) target = $region25
    $region24: #{neural_fp.5} parent=1 // pred_region
      %s150 = ssub.s32 32, 32
      %151 = vsyncadd [#allocation4], %s150
      %s153 = sshll.u32 [#allocation3], 4
      %s154 = int_to_ptr.vmem [resolvable:$true] %s153
      %156 = dma.vmem_to_hbm [thread:$0]  %s154, 32, %s3, [#allocation4]
    $region25: #{neural_fp.5} parent=1 // pred_fallthru
      _
    // Predicated region
    $region26: #{neural_fp.5} parent=1 // pred_check
      _
    $region27: #{neural_fp.5} parent=1 // pred_check_branch
      %158 = sbr.rel (0) target = $region29
    $region28: #{neural_fp.5} parent=1 // pred_region
      %159 = dma.done [#allocation4], 32
    $region29: #{neural_fp.5} parent=1 // pred_fallthru
      _
    %160 = vsyncpa [#allocation4], 1

// kernel: neural_fp.3
$region0: #{neural_fp.3}
  #allocation0 [shape = 'u32[]', space=smem, size = 0x4, offset = 0x4, fixed_abs, tag = 'smem constant byte address 0x4 - core index']
  #allocation1 [shape = 'u32[144,128]{1,0:T(1,128)}', space=vmem, size = 0x12000, scoped, tag = 'internal scratch']
  #allocation2 [shape = 'f32[128,32]{1,0:T(8,128)}', space=vmem, size = 0x10000, scoped, tag = 'scratch operand']
  %s0 = inlined_call_operand.vmem [shape: bf16[128,128], index: 0, kind: input, shape index: {}]
  %s1 = inlined_call_operand.vmem [shape: f32[128,32], index: 1, kind: input, shape index: {}]
  %s2 = inlined_call_operand.vmem [shape: f32[32,32], index: 2, kind: input, shape index: {}]
  %s3 = inlined_call_operand.vmem [shape: f32[1,32], index: 3, kind: input, shape index: {}]
  %s4 = inlined_call_operand.vmem [shape: f32[32,128], index: 4, kind: input, shape index: {}]
  %s5 = inlined_call_operand.vmem [shape: f32[1,128], index: 5, kind: input, shape index: {}]
  %s6 = inlined_call_operand.vmem [shape: f32[128,32], index: 6, kind: output, shape index: {0}]
  %s7 = inlined_call_operand.vmem [shape: f32[128,128], index: 7, kind: output, shape index: {1}]
  %8 = xla_tuple %s6, %s7
  %s9 = sld [smem:[#allocation0]]
  $region50: #{neural_fp.3} parent=0
    _
  %s11 = ssub.s32 1, %s9
  %s12 = scalar_select 0, %s11, %s9
  // Predicated region
  $region2: #{neural_fp.3} parent=0 // pred_check
    _
  $region3: #{neural_fp.3} parent=0 // pred_check_branch
    %14 = sbr.rel (0) target = $region5
  $region4: #{neural_fp.3} parent=0 // pred_region
    _
  $region5: #{neural_fp.3} parent=0 // pred_fallthru
    _
  // Predicated region
  $region6: #{neural_fp.3} parent=0 // pred_check
    _
  $region7: #{neural_fp.3} parent=0 // pred_check_branch
    %16 = sbr.rel (0) target = $region9
  $region8: #{neural_fp.3} parent=0 // pred_region
    _
  $region9: #{neural_fp.3} parent=0 // pred_fallthru
    _
  // Predicated region
  $region10: #{neural_fp.3} parent=0 // pred_check
    _
  $region11: #{neural_fp.3} parent=0 // pred_check_branch
    %18 = sbr.rel (0) target = $region13
  $region12: #{neural_fp.3} parent=0 // pred_region
    _
  $region13: #{neural_fp.3} parent=0 // pred_fallthru
    _
  // Predicated region
  $region14: #{neural_fp.3} parent=0 // pred_check
    _
  $region15: #{neural_fp.3} parent=0 // pred_check_branch
    %20 = sbr.rel (0) target = $region17
  $region16: #{neural_fp.3} parent=0 // pred_region
    _
  $region17: #{neural_fp.3} parent=0 // pred_fallthru
    _
  // Predicated region
  $region18: #{neural_fp.3} parent=0 // pred_check
    _
  $region19: #{neural_fp.3} parent=0 // pred_check_branch
    %22 = sbr.rel (0) target = $region21
  $region20: #{neural_fp.3} parent=0 // pred_region
    _
  $region21: #{neural_fp.3} parent=0 // pred_fallthru
    _
  // Predicated region
  $region22: #{neural_fp.3} parent=0 // pred_check
    _
  $region23: #{neural_fp.3} parent=0 // pred_check_branch
    %24 = sbr.rel (0) target = $region25
  $region24: #{neural_fp.3} parent=0 // pred_region
    _
  $region25: #{neural_fp.3} parent=0 // pred_fallthru
    _
  %p25 = scmp.eq.s32.totalorder 0, 0
  // Predicated region
  $region26: #{neural_fp.3} parent=0 // pred_check
    %p26 = pneg %p25
  $region27: #{neural_fp.3} parent=0 // pred_check_branch
    %28 = sbr.rel (%p26) target = $region29
  $region28: #{neural_fp.3} parent=0 // pred_region
    %vm29 = vcmask 261120
    %30 = vst.msk [vmem:[#allocation2] sm:$0xff] %vm29, 0.0
    %31 = vst.msk [vmem:[#allocation2 + $0x8] sm:$0xff] %vm29, 0.0
    %32 = vst.msk [vmem:[#allocation2 + $0x10] sm:$0xff] %vm29, 0.0
    %33 = vst.msk [vmem:[#allocation2 + $0x18] sm:$0xff] %vm29, 0.0
    %34 = vst.msk [vmem:[#allocation2 + $0x20] sm:$0xff] %vm29, 0.0
    %35 = vst.msk [vmem:[#allocation2 + $0x28] sm:$0xff] %vm29, 0.0
    %36 = vst.msk [vmem:[#allocation2 + $0x30] sm:$0xff] %vm29, 0.0
    %37 = vst.msk [vmem:[#allocation2 + $0x38] sm:$0xff] %vm29, 0.0
    %38 = vst.msk [vmem:[#allocation2 + $0x40] sm:$0xff] %vm29, 0.0
    %39 = vst.msk [vmem:[#allocation2 + $0x48] sm:$0xff] %vm29, 0.0
    %40 = vst.msk [vmem:[#allocation2 + $0x50] sm:$0xff] %vm29, 0.0
    %41 = vst.msk [vmem:[#allocation2 + $0x58] sm:$0xff] %vm29, 0.0
    %42 = vst.msk [vmem:[#allocation2 + $0x60] sm:$0xff] %vm29, 0.0
    %43 = vst.msk [vmem:[#allocation2 + $0x68] sm:$0xff] %vm29, 0.0
    %44 = vst.msk [vmem:[#allocation2 + $0x70] sm:$0xff] %vm29, 0.0
    %45 = vst.msk [vmem:[#allocation2 + $0x78] sm:$0xff] %vm29, 0.0
  $region29: #{neural_fp.3} parent=0 // pred_fallthru
    _
  %v46 = vld [vmem:[%s0] sm:$0xf]
  %v47 = vld [vmem:[%s0 + $0x4] sm:$0xf]
  %v48 = vld [vmem:[%s0 + $0x8] sm:$0xf]
  %v49 = vld [vmem:[%s0 + $0xc] sm:$0xf]
  %v50 = vld [vmem:[%s0 + $0x10] sm:$0xf]
  %v51 = vld [vmem:[%s0 + $0x14] sm:$0xf]
  %v52 = vld [vmem:[%s0 + $0x18] sm:$0xf]
  %v53 = vld [vmem:[%s0 + $0x1c] sm:$0xf]
  %v54 = vld [vmem:[%s0 + $0x20] sm:$0xf]
  %v55 = vld [vmem:[%s0 + $0x24] sm:$0xf]
  %v56 = vld [vmem:[%s0 + $0x28] sm:$0xf]
  %v57 = vld [vmem:[%s0 + $0x2c] sm:$0xf]
  %v58 = vld [vmem:[%s0 + $0x30] sm:$0xf]
  %v59 = vld [vmem:[%s0 + $0x34] sm:$0xf]
  %v60 = vld [vmem:[%s0 + $0x38] sm:$0xf]
  %v61 = vld [vmem:[%s0 + $0x3c] sm:$0xf]
  %v62 = vunpack.c.l.bf16 %v46
  %v63 = vunpack.c.l.bf16 %v47
  %v64 = vunpack.c.l.bf16 %v48
  %v65 = vunpack.c.l.bf16 %v49
  %v66 = vunpack.c.l.bf16 %v50
  %v67 = vunpack.c.l.bf16 %v51
  %v68 = vunpack.c.l.bf16 %v52
  %v69 = vunpack.c.l.bf16 %v53
  %v70 = vunpack.c.l.bf16 %v54
  %v71 = vunpack.c.l.bf16 %v55
  %v72 = vunpack.c.l.bf16 %v56
  %v73 = vunpack.c.l.bf16 %v57
  %v74 = vunpack.c.l.bf16 %v58
  %v75 = vunpack.c.l.bf16 %v59
  %v76 = vunpack.c.l.bf16 %v60
  %v77 = vunpack.c.l.bf16 %v61
  %v78 = vld [vmem:[#allocation2] sm:$0xff]
  %v79 = vld [vmem:[#allocation2 + $0x8] sm:$0xff]
  %v80 = vld [vmem:[#allocation2 + $0x10] sm:$0xff]
  %v81 = vld [vmem:[#allocation2 + $0x18] sm:$0xff]
  %v82 = vld [vmem:[#allocation2 + $0x20] sm:$0xff]
  %v83 = vld [vmem:[#allocation2 + $0x28] sm:$0xff]
  %v84 = vld [vmem:[#allocation2 + $0x30] sm:$0xff]
  %v85 = vld [vmem:[#allocation2 + $0x38] sm:$0xff]
  %v86 = vld [vmem:[#allocation2 + $0x40] sm:$0xff]
  %v87 = vld [vmem:[#allocation2 + $0x48] sm:$0xff]
  %v88 = vld [vmem:[#allocation2 + $0x50] sm:$0xff]
  %v89 = vld [vmem:[#allocation2 + $0x58] sm:$0xff]
  %v90 = vld [vmem:[#allocation2 + $0x60] sm:$0xff]
  %v91 = vld [vmem:[#allocation2 + $0x68] sm:$0xff]
  %v92 = vld [vmem:[#allocation2 + $0x70] sm:$0xff]
  %v93 = vld [vmem:[#allocation2 + $0x78] sm:$0xff]
  %v94 = vld [vmem:[%s1] sm:$0xff]
  %v95 = vld [vmem:[%s1 + $0x8] sm:$0xff]
  %v96 = vld [vmem:[%s1 + $0x10] sm:$0xff]
  %v97 = vld [vmem:[%s1 + $0x18] sm:$0xff]
  %v98 = vld [vmem:[%s1 + $0x20] sm:$0xff]
  %v99 = vld [vmem:[%s1 + $0x28] sm:$0xff]
  %v100 = vld [vmem:[%s1 + $0x30] sm:$0xff]
  %v101 = vld [vmem:[%s1 + $0x38] sm:$0xff]
  %v102 = vld [vmem:[%s1 + $0x40] sm:$0xff]
  %v103 = vld [vmem:[%s1 + $0x48] sm:$0xff]
  %v104 = vld [vmem:[%s1 + $0x50] sm:$0xff]
  %v105 = vld [vmem:[%s1 + $0x58] sm:$0xff]
  %v106 = vld [vmem:[%s1 + $0x60] sm:$0xff]
  %v107 = vld [vmem:[%s1 + $0x68] sm:$0xff]
  %v108 = vld [vmem:[%s1 + $0x70] sm:$0xff]
  %v109 = vld [vmem:[%s1 + $0x78] sm:$0xff]
  %110 = vmatprep.subr.mxu0 0.0
  %111 = vmatpush1.msra.mxu0 %v94
  %112 = vmatprep.subr.mxu0 0.0
  %113 = vmatpush1.msra.mxu0 %v95
  %114 = vmatprep.subr.mxu0 0.0
  %115 = vmatpush1.msra.mxu0 %v96
  %116 = vmatprep.subr.mxu0 0.0
  %117 = vmatpush1.msra.mxu0 %v97
  %118 = vmatprep.subr.mxu0 0.0
  %119 = vmatpush1.msra.mxu0 %v98
  %120 = vmatprep.subr.mxu0 0.0
  %121 = vmatpush1.msra.mxu0 %v99
  %122 = vmatprep.subr.mxu0 0.0
  %123 = vmatpush1.msra.mxu0 %v100
  %124 = vmatprep.subr.mxu0 0.0
  %125 = vmatpush1.msra.mxu0 %v101
  %126 = vmatprep.subr.mxu0 0.0
  %127 = vmatpush1.msra.mxu0 %v102
  %128 = vmatprep.subr.mxu0 0.0
  %129 = vmatpush1.msra.mxu0 %v103
  %130 = vmatprep.subr.mxu0 0.0
  %131 = vmatpush1.msra.mxu0 %v104
  %132 = vmatprep.subr.mxu0 0.0
  %133 = vmatpush1.msra.mxu0 %v105
  %134 = vmatprep.subr.mxu0 0.0
  %135 = vmatpush1.msra.mxu0 %v106
  %136 = vmatprep.subr.mxu0 0.0
  %137 = vmatpush1.msra.mxu0 %v107
  %138 = vmatprep.subr.mxu0 0.0
  %139 = vmatpush1.msra.mxu0 %v108
  %140 = vmatprep.subr.mxu0 0.0
  %141 = vmatpush1.msra.mxu0 %v109
  %142 = vmatprep.subr.mxu0 0.0
  %143 = vmatpush1.msra.mxu0 0.0
  %144 = vmatprep.subr.mxu0 0.0
  %145 = vmatpush1.msra.mxu0 0.0
  %146 = vmatprep.subr.mxu0 0.0
  %147 = vmatpush1.msra.mxu0 0.0
  %148 = vmatprep.subr.mxu0 0.0
  %149 = vmatpush1.msra.mxu0 0.0
  %150 = vmatprep.subr.mxu0 0.0
  %151 = vmatpush1.msra.mxu0 0.0
  %152 = vmatprep.subr.mxu0 0.0
  %153 = vmatpush1.msra.mxu0 0.0
  %154 = vmatprep.subr.mxu0 0.0
  %155 = vmatpush1.msra.mxu0 0.0
  %156 = vmatprep.subr.mxu0 0.0
  %157 = vmatpush1.msra.mxu0 0.0
  %158 = vmatprep.subr.mxu0 0.0
  %159 = vmatpush1.msra.mxu0 0.0
  %160 = vmatprep.subr.mxu0 0.0
  %161 = vmatpush1.msra.mxu0 0.0
  %162 = vmatprep.subr.mxu0 0.0
  %163 = vmatpush1.msra.mxu0 0.0
  %164 = vmatprep.subr.mxu0 0.0
  %165 = vmatpush1.msra.mxu0 0.0
  %166 = vmatprep.subr.mxu0 0.0
  %167 = vmatpush1.msra.mxu0 0.0
  %168 = vmatprep.subr.mxu0 0.0
  %169 = vmatpush1.msra.mxu0 0.0
  %170 = vmatprep.subr.mxu0 0.0
  %171 = vmatpush1.msra.mxu0 0.0
  %172 = vmatprep.subr.mxu0 0.0
  %173 = vmatpush1.msra.mxu0 0.0
  %174 = vmatprep.mubr.f32.mxu0 0.0
  %175 = vmatmul.mubr.f32.gmra.mrb[0].mxu0 %v62
  %v176 = vpop.f32.mrb[0].mxu0
  %v177 = vadd.f32 0.0, %v176
  %v178 = vpop.f32.mrb[0].mxu0
  %179 = vmatprep.mubr.f32.mxu0 0.0
  %180 = vmatmul.mubr.f32.gmra.mrb[0].mxu0 %v63
  %v181 = vpop.f32.mrb[0].mxu0
  %v182 = vadd.f32 0.0, %v181
  %v183 = vpop.f32.mrb[0].mxu0
  %184 = vmatprep.mubr.f32.mxu0 0.0
  %185 = vmatmul.mubr.f32.gmra.mrb[0].mxu0 %v64
  %v186 = vpop.f32.mrb[0].mxu0
  %v187 = vadd.f32 0.0, %v186
  %v188 = vpop.f32.mrb[0].mxu0
  %189 = vmatprep.mubr.f32.mxu0 0.0
  %190 = vmatmul.mubr.f32.gmra.mrb[0].mxu0 %v65
  %v191 = vpop.f32.mrb[0].mxu0
  %v192 = vadd.f32 0.0, %v191
  %v193 = vpop.f32.mrb[0].mxu0
  %194 = vmatprep.mubr.f32.mxu0 0.0
  %195 = vmatmul.mubr.f32.gmra.mrb[0].mxu0 %v66
  %v196 = vpop.f32.mrb[0].mxu0
  %v197 = vadd.f32 0.0, %v196
  %v198 = vpop.f32.mrb[0].mxu0
  %199 = vmatprep.mubr.f32.mxu0 0.0
  %200 = vmatmul.mubr.f32.gmra.mrb[0].mxu0 %v67
  %v201 = vpop.f32.mrb[0].mxu0
  %v202 = vadd.f32 0.0, %v201
  %v203 = vpop.f32.mrb[0].mxu0
  %204 = vmatprep.mubr.f32.mxu0 0.0
  %205 = vmatmul.mubr.f32.gmra.mrb[0].mxu0 %v68
  %v206 = vpop.f32.mrb[0].mxu0
  %v207 = vadd.f32 0.0, %v206
  %v208 = vpop.f32.mrb[0].mxu0
  %209 = vmatprep.mubr.f32.mxu0 0.0
  %210 = vmatmul.mubr.f32.gmra.mrb[0].mxu0 %v69
  %v211 = vpop.f32.mrb[0].mxu0
  %v212 = vadd.f32 0.0, %v211
  %v213 = vpop.f32.mrb[0].mxu0
  %214 = vmatprep.mubr.f32.mxu0 0.0
  %215 = vmatmul.mubr.f32.gmra.mrb[0].mxu0 %v70
  %v216 = vpop.f32.mrb[0].mxu0
  %v217 = vadd.f32 0.0, %v216
  %v218 = vpop.f32.mrb[0].mxu0
  %219 = vmatprep.mubr.f32.mxu0 0.0
  %220 = vmatmul.mubr.f32.gmra.mrb[0].mxu0 %v71
  %v221 = vpop.f32.mrb[0].mxu0
  %v222 = vadd.f32 0.0, %v221
  %v223 = vpop.f32.mrb[0].mxu0
  %224 = vmatprep.mubr.f32.mxu0 0.0
  %225 = vmatmul.mubr.f32.gmra.mrb[0].mxu0 %v72
  %v226 = vpop.f32.mrb[0].mxu0
  %v227 = vadd.f32 0.0, %v226
  %v228 = vpop.f32.mrb[0].mxu0
  %229 = vmatprep.mubr.f32.mxu0 0.0
  %230 = vmatmul.mubr.f32.gmra.mrb[0].mxu0 %v73
  %v231 = vpop.f32.mrb[0].mxu0
  %v232 = vadd.f32 0.0, %v231
  %v233 = vpop.f32.mrb[0].mxu0
  %234 = vmatprep.mubr.f32.mxu0 0.0
  %235 = vmatmul.mubr.f32.gmra.mrb[0].mxu0 %v74
  %v236 = vpop.f32.mrb[0].mxu0
  %v237 = vadd.f32 0.0, %v236
  %v238 = vpop.f32.mrb[0].mxu0
  %239 = vmatprep.mubr.f32.mxu0 0.0
  %240 = vmatmul.mubr.f32.gmra.mrb[0].mxu0 %v75
  %v241 = vpop.f32.mrb[0].mxu0
  %v242 = vadd.f32 0.0, %v241
  %v243 = vpop.f32.mrb[0].mxu0
  %244 = vmatprep.mubr.f32.mxu0 0.0
  %245 = vmatmul.mubr.f32.gmra.mrb[0].mxu0 %v76
  %v246 = vpop.f32.mrb[0].mxu0
  %v247 = vadd.f32 0.0, %v246
  %v248 = vpop.f32.mrb[0].mxu0
  %249 = vmatprep.mubr.f32.mxu0 0.0
  %250 = vmatmul.mubr.f32.gmra.mrb[0].mxu0 %v77
  %v251 = vpop.f32.mrb[0].mxu0
  %v252 = vadd.f32 0.0, %v251
  %v253 = vpop.f32.mrb[0].mxu0
  %254 = vdwg.mxu0
  %v255 = vadd.f32 %v78, %v177
  %v256 = vadd.f32 %v79, %v182
  %v257 = vadd.f32 %v80, %v187
  %v258 = vadd.f32 %v81, %v192
  %v259 = vadd.f32 %v82, %v197
  %v260 = vadd.f32 %v83, %v202
  %v261 = vadd.f32 %v84, %v207
  %v262 = vadd.f32 %v85, %v212
  %v263 = vadd.f32 %v86, %v217
  %v264 = vadd.f32 %v87, %v222
  %v265 = vadd.f32 %v88, %v227
  %v266 = vadd.f32 %v89, %v232
  %v267 = vadd.f32 %v90, %v237
  %v268 = vadd.f32 %v91, %v242
  %v269 = vadd.f32 %v92, %v247
  %v270 = vadd.f32 %v93, %v252
  %vm271 = vcmask 261120
  %272 = vst.msk [vmem:[#allocation2] sm:$0xff] %vm271, %v255
  %273 = vst.msk [vmem:[#allocation2 + $0x8] sm:$0xff] %vm271, %v256
  %274 = vst.msk [vmem:[#allocation2 + $0x10] sm:$0xff] %vm271, %v257
  %275 = vst.msk [vmem:[#allocation2 + $0x18] sm:$0xff] %vm271, %v258
  %276 = vst.msk [vmem:[#allocation2 + $0x20] sm:$0xff] %vm271, %v259
  %277 = vst.msk [vmem:[#allocation2 + $0x28] sm:$0xff] %vm271, %v260
  %278 = vst.msk [vmem:[#allocation2 + $0x30] sm:$0xff] %vm271, %v261
  %279 = vst.msk [vmem:[#allocation2 + $0x38] sm:$0xff] %vm271, %v262
  %280 = vst.msk [vmem:[#allocation2 + $0x40] sm:$0xff] %vm271, %v263
  %281 = vst.msk [vmem:[#allocation2 + $0x48] sm:$0xff] %vm271, %v264
  %282 = vst.msk [vmem:[#allocation2 + $0x50] sm:$0xff] %vm271, %v265
  %283 = vst.msk [vmem:[#allocation2 + $0x58] sm:$0xff] %vm271, %v266
  %284 = vst.msk [vmem:[#allocation2 + $0x60] sm:$0xff] %vm271, %v267
  %285 = vst.msk [vmem:[#allocation2 + $0x68] sm:$0xff] %vm271, %v268
  %286 = vst.msk [vmem:[#allocation2 + $0x70] sm:$0xff] %vm271, %v269
  %287 = vst.msk [vmem:[#allocation2 + $0x78] sm:$0xff] %vm271, %v270
  // Predicated region
  $region30: #{neural_fp.3} parent=0 // pred_check
    %p288 = pneg %p25
  $region31: #{neural_fp.3} parent=0 // pred_check_branch
    %290 = sbr.rel (%p288) target = $region33
  $region32: #{neural_fp.3} parent=0 // pred_region
    %v291 = vld [vmem:[#allocation2] sm:$0xff]
    %v292 = vld [vmem:[#allocation2 + $0x8] sm:$0xff]
    %v293 = vld [vmem:[#allocation2 + $0x10] sm:$0xff]
    %v294 = vld [vmem:[#allocation2 + $0x18] sm:$0xff]
    %v295 = vld [vmem:[#allocation2 + $0x20] sm:$0xff]
    %v296 = vld [vmem:[#allocation2 + $0x28] sm:$0xff]
    %v297 = vld [vmem:[#allocation2 + $0x30] sm:$0xff]
    %v298 = vld [vmem:[#allocation2 + $0x38] sm:$0xff]
    %v299 = vld [vmem:[#allocation2 + $0x40] sm:$0xff]
    %v300 = vld [vmem:[#allocation2 + $0x48] sm:$0xff]
    %v301 = vld [vmem:[#allocation2 + $0x50] sm:$0xff]
    %v302 = vld [vmem:[#allocation2 + $0x58] sm:$0xff]
    %v303 = vld [vmem:[#allocation2 + $0x60] sm:$0xff]
    %v304 = vld [vmem:[#allocation2 + $0x68] sm:$0xff]
    %v305 = vld [vmem:[#allocation2 + $0x70] sm:$0xff]
    %v306 = vld [vmem:[#allocation2 + $0x78] sm:$0xff]
    %v307 = vld [vmem:[%s2] sm:$0xff]
    %v308 = vld [vmem:[%s2 + $0x8] sm:$0xff]
    %v309 = vld [vmem:[%s2 + $0x10] sm:$0xff]
    %v310 = vld [vmem:[%s2 + $0x18] sm:$0xff]
    %v311 = vld [vmem:[%s3] sm:$0x1]
    %v313 = vlaneseq
    %v314 = vshrl.u32 %v313, 7
    %v315 = vsub.s32 0, %v314
    %v316 = vrot.slane %v311, %v315
    %v319 = vsel %vm271, %v291, 0
    %v322 = vsel %vm271, %v292, 0
    %v325 = vsel %vm271, %v293, 0
    %v328 = vsel %vm271, %v294, 0
    %v331 = vsel %vm271, %v295, 0
    %v334 = vsel %vm271, %v296, 0
    %v337 = vsel %vm271, %v297, 0
    %v340 = vsel %vm271, %v298, 0
    %v343 = vsel %vm271, %v299, 0
    %v346 = vsel %vm271, %v300, 0
    %v349 = vsel %vm271, %v301, 0
    %v352 = vsel %vm271, %v302, 0
    %v355 = vsel %vm271, %v303, 0
    %v358 = vsel %vm271, %v304, 0
    %v361 = vsel %vm271, %v305, 0
    %v364 = vsel %vm271, %v306, 0
    %366 = vmatprep.subr.mxu0 0.0
    %367 = vmatpush1.msra.mxu0 %v307
    %368 = vmatprep.subr.mxu0 0.0
    %369 = vmatpush1.msra.mxu0 %v308
    %370 = vmatprep.subr.mxu0 0.0
    %371 = vmatpush1.msra.mxu0 %v309
    %372 = vmatprep.subr.mxu0 0.0
    %373 = vmatpush1.msra.mxu0 %v310
    %374 = vmatprep.subr.mxu0 0.0
    %375 = vmatpush1.msra.mxu0 0.0
    %376 = vmatprep.subr.mxu0 0.0
    %377 = vmatpush1.msra.mxu0 0.0
    %378 = vmatprep.subr.mxu0 0.0
    %379 = vmatpush1.msra.mxu0 0.0
    %380 = vmatprep.subr.mxu0 0.0
    %381 = vmatpush1.msra.mxu0 0.0
    %382 = vmatprep.subr.mxu0 0.0
    %383 = vmatpush1.msra.mxu0 0.0
    %384 = vmatprep.subr.mxu0 0.0
    %385 = vmatpush1.msra.mxu0 0.0
    %386 = vmatprep.subr.mxu0 0.0
    %387 = vmatpush1.msra.mxu0 0.0
    %388 = vmatprep.subr.mxu0 0.0
    %389 = vmatpush1.msra.mxu0 0.0
    %390 = vmatprep.subr.mxu0 0.0
    %391 = vmatpush1.msra.mxu0 0.0
    %392 = vmatprep.subr.mxu0 0.0
    %393 = vmatpush1.msra.mxu0 0.0
    %394 = vmatprep.subr.mxu0 0.0
    %395 = vmatpush1.msra.mxu0 0.0
    %396 = vmatprep.subr.mxu0 0.0
    %397 = vmatpush1.msra.mxu0 0.0
    %398 = vmatprep.subr.mxu0 0.0
    %399 = vmatpush1.msra.mxu0 0.0
    %400 = vmatprep.subr.mxu0 0.0
    %401 = vmatpush1.msra.mxu0 0.0
    %402 = vmatprep.subr.mxu0 0.0
    %403 = vmatpush1.msra.mxu0 0.0
    %404 = vmatprep.subr.mxu0 0.0
    %405 = vmatpush1.msra.mxu0 0.0
    %406 = vmatprep.subr.mxu0 0.0
    %407 = vmatpush1.msra.mxu0 0.0
    %408 = vmatprep.subr.mxu0 0.0
    %409 = vmatpush1.msra.mxu0 0.0
    %410 = vmatprep.subr.mxu0 0.0
    %411 = vmatpush1.msra.mxu0 0.0
    %412 = vmatprep.subr.mxu0 0.0
    %413 = vmatpush1.msra.mxu0 0.0
    %414 = vmatprep.subr.mxu0 0.0
    %415 = vmatpush1.msra.mxu0 0.0
    %416 = vmatprep.subr.mxu0 0.0
    %417 = vmatpush1.msra.mxu0 0.0
    %418 = vmatprep.subr.mxu0 0.0
    %419 = vmatpush1.msra.mxu0 0.0
    %420 = vmatprep.subr.mxu0 0.0
    %421 = vmatpush1.msra.mxu0 0.0
    %422 = vmatprep.subr.mxu0 0.0
    %423 = vmatpush1.msra.mxu0 0.0
    %424 = vmatprep.subr.mxu0 0.0
    %425 = vmatpush1.msra.mxu0 0.0
    %426 = vmatprep.subr.mxu0 0.0
    %427 = vmatpush1.msra.mxu0 0.0
    %428 = vmatprep.subr.mxu0 0.0
    %429 = vmatpush1.msra.mxu0 0.0
    %430 = vmatprep.mubr.f32.mxu0 0.0
    %431 = vmatmul.mubr.f32.gmra.mrb[0].mxu0 %v319
    %v432 = vpop.f32.mrb[0].mxu0
    %v433 = vadd.f32 %v316, %v432
    %v434 = vpop.f32.mrb[0].mxu0
    %435 = vmatprep.mubr.f32.mxu0 0.0
    %436 = vmatmul.mubr.f32.gmra.mrb[0].mxu0 %v322
    %v437 = vpop.f32.mrb[0].mxu0
    %v438 = vadd.f32 %v316, %v437
    %v439 = vpop.f32.mrb[0].mxu0
    %440 = vmatprep.mubr.f32.mxu0 0.0
    %441 = vmatmul.mubr.f32.gmra.mrb[0].mxu0 %v325
    %v442 = vpop.f32.mrb[0].mxu0
    %v443 = vadd.f32 %v316, %v442
    %v444 = vpop.f32.mrb[0].mxu0
    %445 = vmatprep.mubr.f32.mxu0 0.0
    %446 = vmatmul.mubr.f32.gmra.mrb[0].mxu0 %v328
    %v447 = vpop.f32.mrb[0].mxu0
    %v448 = vadd.f32 %v316, %v447
    %v449 = vpop.f32.mrb[0].mxu0
    %450 = vmatprep.mubr.f32.mxu0 0.0
    %451 = vmatmul.mubr.f32.gmra.mrb[0].mxu0 %v331
    %v452 = vpop.f32.mrb[0].mxu0
    %v453 = vadd.f32 %v316, %v452
    %v454 = vpop.f32.mrb[0].mxu0
    %455 = vmatprep.mubr.f32.mxu0 0.0
    %456 = vmatmul.mubr.f32.gmra.mrb[0].mxu0 %v334
    %v457 = vpop.f32.mrb[0].mxu0
    %v458 = vadd.f32 %v316, %v457
    %v459 = vpop.f32.mrb[0].mxu0
    %460 = vmatprep.mubr.f32.mxu0 0.0
    %461 = vmatmul.mubr.f32.gmra.mrb[0].mxu0 %v337
    %v462 = vpop.f32.mrb[0].mxu0
    %v463 = vadd.f32 %v316, %v462
    %v464 = vpop.f32.mrb[0].mxu0
    %465 = vmatprep.mubr.f32.mxu0 0.0
    %466 = vmatmul.mubr.f32.gmra.mrb[0].mxu0 %v340
    %v467 = vpop.f32.mrb[0].mxu0
    %v468 = vadd.f32 %v316, %v467
    %v469 = vpop.f32.mrb[0].mxu0
    %470 = vmatprep.mubr.f32.mxu0 0.0
    %471 = vmatmul.mubr.f32.gmra.mrb[0].mxu0 %v343
    %v472 = vpop.f32.mrb[0].mxu0
    %v473 = vadd.f32 %v316, %v472
    %v474 = vpop.f32.mrb[0].mxu0
    %475 = vmatprep.mubr.f32.mxu0 0.0
    %476 = vmatmul.mubr.f32.gmra.mrb[0].mxu0 %v346
    %v477 = vpop.f32.mrb[0].mxu0
    %v478 = vadd.f32 %v316, %v477
    %v479 = vpop.f32.mrb[0].mxu0
    %480 = vmatprep.mubr.f32.mxu0 0.0
    %481 = vmatmul.mubr.f32.gmra.mrb[0].mxu0 %v349
    %v482 = vpop.f32.mrb[0].mxu0
    %v483 = vadd.f32 %v316, %v482
    %v484 = vpop.f32.mrb[0].mxu0
    %485 = vmatprep.mubr.f32.mxu0 0.0
    %486 = vmatmul.mubr.f32.gmra.mrb[0].mxu0 %v352
    %v487 = vpop.f32.mrb[0].mxu0
    %v488 = vadd.f32 %v316, %v487
    %v489 = vpop.f32.mrb[0].mxu0
    %490 = vmatprep.mubr.f32.mxu0 0.0
    %491 = vmatmul.mubr.f32.gmra.mrb[0].mxu0 %v355
    %v492 = vpop.f32.mrb[0].mxu0
    %v493 = vadd.f32 %v316, %v492
    %v494 = vpop.f32.mrb[0].mxu0
    %495 = vmatprep.mubr.f32.mxu0 0.0
    %496 = vmatmul.mubr.f32.gmra.mrb[0].mxu0 %v358
    %v497 = vpop.f32.mrb[0].mxu0
    %v498 = vadd.f32 %v316, %v497
    %v499 = vpop.f32.mrb[0].mxu0
    %500 = vmatprep.mubr.f32.mxu0 0.0
    %501 = vmatmul.mubr.f32.gmra.mrb[0].mxu0 %v361
    %v502 = vpop.f32.mrb[0].mxu0
    %v503 = vadd.f32 %v316, %v502
    %v504 = vpop.f32.mrb[0].mxu0
    %505 = vmatprep.mubr.f32.mxu0 0.0
    %506 = vmatmul.mubr.f32.gmra.mrb[0].mxu0 %v364
    %v507 = vpop.f32.mrb[0].mxu0
    %v508 = vadd.f32 %v316, %v507
    %v509 = vpop.f32.mrb[0].mxu0
    %510 = vdwg.mxu0
    %v511 = vxor.u32 %v433, 2147483648
    %v512 = vxor.u32 %v438, 2147483648
    %v513 = vxor.u32 %v443, 2147483648
    %v514 = vxor.u32 %v448, 2147483648
    %v515 = vxor.u32 %v453, 2147483648
    %v516 = vxor.u32 %v458, 2147483648
    %v517 = vxor.u32 %v463, 2147483648
    %v518 = vxor.u32 %v468, 2147483648
    %v519 = vxor.u32 %v473, 2147483648
    %v520 = vxor.u32 %v478, 2147483648
    %v521 = vxor.u32 %v483, 2147483648
    %v522 = vxor.u32 %v488, 2147483648
    %v523 = vxor.u32 %v493, 2147483648
    %v524 = vxor.u32 %v498, 2147483648
    %v525 = vxor.u32 %v503, 2147483648
    %v526 = vxor.u32 %v508, 2147483648
    %v527 = vmul.f32 %v511, 1.442695
    %v528 = vpow.pop %v527
    %v529 = vmul.f32 %v512, 1.442695
    %v530 = vpow.pop %v529
    %v531 = vmul.f32 %v513, 1.442695
    %v532 = vpow.pop %v531
    %v533 = vmul.f32 %v514, 1.442695
    %v534 = vpow.pop %v533
    %v535 = vmul.f32 %v515, 1.442695
    %v536 = vpow.pop %v535
    %v537 = vmul.f32 %v516, 1.442695
    %v538 = vpow.pop %v537
    %v539 = vmul.f32 %v517, 1.442695
    %v540 = vpow.pop %v539
    %v541 = vmul.f32 %v518, 1.442695
    %v542 = vpow.pop %v541
    %v543 = vmul.f32 %v519, 1.442695
    %v544 = vpow.pop %v543
    %v545 = vmul.f32 %v520, 1.442695
    %v546 = vpow.pop %v545
    %v547 = vmul.f32 %v521, 1.442695
    %v548 = vpow.pop %v547
    %v549 = vmul.f32 %v522, 1.442695
    %v550 = vpow.pop %v549
    %v551 = vmul.f32 %v523, 1.442695
    %v552 = vpow.pop %v551
    %v553 = vmul.f32 %v524, 1.442695
    %v554 = vpow.pop %v553
    %v555 = vmul.f32 %v525, 1.442695
    %v556 = vpow.pop %v555
    %v557 = vmul.f32 %v526, 1.442695
    %v558 = vpow.pop %v557
    %v559 = vadd.f32 %v528, 1.0
    %v560 = vadd.f32 %v530, 1.0
    %v561 = vadd.f32 %v532, 1.0
    %v562 = vadd.f32 %v534, 1.0
    %v563 = vadd.f32 %v536, 1.0
    %v564 = vadd.f32 %v538, 1.0
    %v565 = vadd.f32 %v540, 1.0
    %v566 = vadd.f32 %v542, 1.0
    %v567 = vadd.f32 %v544, 1.0
    %v568 = vadd.f32 %v546, 1.0
    %v569 = vadd.f32 %v548, 1.0
    %v570 = vadd.f32 %v550, 1.0
    %v571 = vadd.f32 %v552, 1.0
    %v572 = vadd.f32 %v554, 1.0
    %v573 = vadd.f32 %v556, 1.0
    %v574 = vadd.f32 %v558, 1.0
    %v575 = vrcp.pop %v559
    %v576 = vmul.f32 1.0, %v575
    %v577 = vrcp.pop %v560
    %v578 = vmul.f32 1.0, %v577
    %v579 = vrcp.pop %v561
    %v580 = vmul.f32 1.0, %v579
    %v581 = vrcp.pop %v562
    %v582 = vmul.f32 1.0, %v581
    %v583 = vrcp.pop %v563
    %v584 = vmul.f32 1.0, %v583
    %v585 = vrcp.pop %v564
    %v586 = vmul.f32 1.0, %v585
    %v587 = vrcp.pop %v565
    %v588 = vmul.f32 1.0, %v587
    %v589 = vrcp.pop %v566
    %v590 = vmul.f32 1.0, %v589
    %v591 = vrcp.pop %v567
    %v592 = vmul.f32 1.0, %v591
    %v593 = vrcp.pop %v568
    %v594 = vmul.f32 1.0, %v593
    %v595 = vrcp.pop %v569
    %v596 = vmul.f32 1.0, %v595
    %v597 = vrcp.pop %v570
    %v598 = vmul.f32 1.0, %v597
    %v599 = vrcp.pop %v571
    %v600 = vmul.f32 1.0, %v599
    %v601 = vrcp.pop %v572
    %v602 = vmul.f32 1.0, %v601
    %v603 = vrcp.pop %v573
    %v604 = vmul.f32 1.0, %v603
    %v605 = vrcp.pop %v574
    %v606 = vmul.f32 1.0, %v605
    %v607 = vld [vmem:[%s4] sm:$0xff]
    %v608 = vld [vmem:[%s4 + $0x8] sm:$0xff]
    %v609 = vld [vmem:[%s4 + $0x10] sm:$0xff]
    %v610 = vld [vmem:[%s4 + $0x18] sm:$0xff]
    %v611 = vld [vmem:[%s5] sm:$0x1]
    %v613 = vlaneseq
    %v614 = vshrl.u32 %v613, 7
    %v615 = vsub.s32 0, %v614
    %v616 = vrot.slane %v611, %v615
    %v619 = vsel %vm271, %v576, 0
    %v622 = vsel %vm271, %v578, 0
    %v625 = vsel %vm271, %v580, 0
    %v628 = vsel %vm271, %v582, 0
    %v631 = vsel %vm271, %v584, 0
    %v634 = vsel %vm271, %v586, 0
    %v637 = vsel %vm271, %v588, 0
    %v640 = vsel %vm271, %v590, 0
    %v643 = vsel %vm271, %v592, 0
    %v646 = vsel %vm271, %v594, 0
    %v649 = vsel %vm271, %v596, 0
    %v652 = vsel %vm271, %v598, 0
    %v655 = vsel %vm271, %v600, 0
    %v658 = vsel %vm271, %v602, 0
    %v661 = vsel %vm271, %v604, 0
    %v664 = vsel %vm271, %v606, 0
    %666 = vmatprep.subr.mxu0 0.0
    %667 = vmatpush1.msra.mxu0 %v607
    %668 = vmatprep.subr.mxu0 0.0
    %669 = vmatpush1.msra.mxu0 %v608
    %670 = vmatprep.subr.mxu0 0.0
    %671 = vmatpush1.msra.mxu0 %v609
    %672 = vmatprep.subr.mxu0 0.0
    %673 = vmatpush1.msra.mxu0 %v610
    %674 = vmatprep.subr.mxu0 0.0
    %675 = vmatpush1.msra.mxu0 0.0
    %676 = vmatprep.subr.mxu0 0.0
    %677 = vmatpush1.msra.mxu0 0.0
    %678 = vmatprep.subr.mxu0 0.0
    %679 = vmatpush1.msra.mxu0 0.0
    %680 = vmatprep.subr.mxu0 0.0
    %681 = vmatpush1.msra.mxu0 0.0
    %682 = vmatprep.subr.mxu0 0.0
    %683 = vmatpush1.msra.mxu0 0.0
    %684 = vmatprep.subr.mxu0 0.0
    %685 = vmatpush1.msra.mxu0 0.0
    %686 = vmatprep.subr.mxu0 0.0
    %687 = vmatpush1.msra.mxu0 0.0
    %688 = vmatprep.subr.mxu0 0.0
    %689 = vmatpush1.msra.mxu0 0.0
    %690 = vmatprep.subr.mxu0 0.0
    %691 = vmatpush1.msra.mxu0 0.0
    %692 = vmatprep.subr.mxu0 0.0
    %693 = vmatpush1.msra.mxu0 0.0
    %694 = vmatprep.subr.mxu0 0.0
    %695 = vmatpush1.msra.mxu0 0.0
    %696 = vmatprep.subr.mxu0 0.0
    %697 = vmatpush1.msra.mxu0 0.0
    %698 = vmatprep.subr.mxu0 0.0
    %699 = vmatpush1.msra.mxu0 0.0
    %700 = vmatprep.subr.mxu0 0.0
    %701 = vmatpush1.msra.mxu0 0.0
    %702 = vmatprep.subr.mxu0 0.0
    %703 = vmatpush1.msra.mxu0 0.0
    %704 = vmatprep.subr.mxu0 0.0
    %705 = vmatpush1.msra.mxu0 0.0
    %706 = vmatprep.subr.mxu0 0.0
    %707 = vmatpush1.msra.mxu0 0.0
    %708 = vmatprep.subr.mxu0 0.0
    %709 = vmatpush1.msra.mxu0 0.0
    %710 = vmatprep.subr.mxu0 0.0
    %711 = vmatpush1.msra.mxu0 0.0
    %712 = vmatprep.subr.mxu0 0.0
    %713 = vmatpush1.msra.mxu0 0.0
    %714 = vmatprep.subr.mxu0 0.0
    %715 = vmatpush1.msra.mxu0 0.0
    %716 = vmatprep.subr.mxu0 0.0
    %717 = vmatpush1.msra.mxu0 0.0
    %718 = vmatprep.subr.mxu0 0.0
    %719 = vmatpush1.msra.mxu0 0.0
    %720 = vmatprep.subr.mxu0 0.0
    %721 = vmatpush1.msra.mxu0 0.0
    %722 = vmatprep.subr.mxu0 0.0
    %723 = vmatpush1.msra.mxu0 0.0
    %724 = vmatprep.subr.mxu0 0.0
    %725 = vmatpush1.msra.mxu0 0.0
    %726 = vmatprep.subr.mxu0 0.0
    %727 = vmatpush1.msra.mxu0 0.0
    %728 = vmatprep.subr.mxu0 0.0
    %729 = vmatpush1.msra.mxu0 0.0
    %730 = vmatprep.mubr.f32.mxu0 0.0
    %731 = vmatmul.mubr.f32.gmra.mrb[0].mxu0 %v619
    %v732 = vpop.f32.mrb[0].mxu0
    %v733 = vadd.f32 %v616, %v732
    %v734 = vpop.f32.mrb[0].mxu0
    %735 = vmatprep.mubr.f32.mxu0 0.0
    %736 = vmatmul.mubr.f32.gmra.mrb[0].mxu0 %v622
    %v737 = vpop.f32.mrb[0].mxu0
    %v738 = vadd.f32 %v616, %v737
    %v739 = vpop.f32.mrb[0].mxu0
    %740 = vmatprep.mubr.f32.mxu0 0.0
    %741 = vmatmul.mubr.f32.gmra.mrb[0].mxu0 %v625
    %v742 = vpop.f32.mrb[0].mxu0
    %v743 = vadd.f32 %v616, %v742
    %v744 = vpop.f32.mrb[0].mxu0
    %745 = vmatprep.mubr.f32.mxu0 0.0
    %746 = vmatmul.mubr.f32.gmra.mrb[0].mxu0 %v628
    %v747 = vpop.f32.mrb[0].mxu0
    %v748 = vadd.f32 %v616, %v747
    %v749 = vpop.f32.mrb[0].mxu0
    %750 = vmatprep.mubr.f32.mxu0 0.0
    %751 = vmatmul.mubr.f32.gmra.mrb[0].mxu0 %v631
    %v752 = vpop.f32.mrb[0].mxu0
    %v753 = vadd.f32 %v616, %v752
    %v754 = vpop.f32.mrb[0].mxu0
    %755 = vmatprep.mubr.f32.mxu0 0.0
    %756 = vmatmul.mubr.f32.gmra.mrb[0].mxu0 %v634
    %v757 = vpop.f32.mrb[0].mxu0
    %v758 = vadd.f32 %v616, %v757
    %v759 = vpop.f32.mrb[0].mxu0
    %760 = vmatprep.mubr.f32.mxu0 0.0
    %761 = vmatmul.mubr.f32.gmra.mrb[0].mxu0 %v637
    %v762 = vpop.f32.mrb[0].mxu0
    %v763 = vadd.f32 %v616, %v762
    %v764 = vpop.f32.mrb[0].mxu0
    %765 = vmatprep.mubr.f32.mxu0 0.0
    %766 = vmatmul.mubr.f32.gmra.mrb[0].mxu0 %v640
    %v767 = vpop.f32.mrb[0].mxu0
    %v768 = vadd.f32 %v616, %v767
    %v769 = vpop.f32.mrb[0].mxu0
    %770 = vmatprep.mubr.f32.mxu0 0.0
    %771 = vmatmul.mubr.f32.gmra.mrb[0].mxu0 %v643
    %v772 = vpop.f32.mrb[0].mxu0
    %v773 = vadd.f32 %v616, %v772
    %v774 = vpop.f32.mrb[0].mxu0
    %775 = vmatprep.mubr.f32.mxu0 0.0
    %776 = vmatmul.mubr.f32.gmra.mrb[0].mxu0 %v646
    %v777 = vpop.f32.mrb[0].mxu0
    %v778 = vadd.f32 %v616, %v777
    %v779 = vpop.f32.mrb[0].mxu0
    %780 = vmatprep.mubr.f32.mxu0 0.0
    %781 = vmatmul.mubr.f32.gmra.mrb[0].mxu0 %v649
    %v782 = vpop.f32.mrb[0].mxu0
    %v783 = vadd.f32 %v616, %v782
    %v784 = vpop.f32.mrb[0].mxu0
    %785 = vmatprep.mubr.f32.mxu0 0.0
    %786 = vmatmul.mubr.f32.gmra.mrb[0].mxu0 %v652
    %v787 = vpop.f32.mrb[0].mxu0
    %v788 = vadd.f32 %v616, %v787
    %v789 = vpop.f32.mrb[0].mxu0
    %790 = vmatprep.mubr.f32.mxu0 0.0
    %791 = vmatmul.mubr.f32.gmra.mrb[0].mxu0 %v655
    %v792 = vpop.f32.mrb[0].mxu0
    %v793 = vadd.f32 %v616, %v792
    %v794 = vpop.f32.mrb[0].mxu0
    %795 = vmatprep.mubr.f32.mxu0 0.0
    %796 = vmatmul.mubr.f32.gmra.mrb[0].mxu0 %v658
    %v797 = vpop.f32.mrb[0].mxu0
    %v798 = vadd.f32 %v616, %v797
    %v799 = vpop.f32.mrb[0].mxu0
    %800 = vmatprep.mubr.f32.mxu0 0.0
    %801 = vmatmul.mubr.f32.gmra.mrb[0].mxu0 %v661
    %v802 = vpop.f32.mrb[0].mxu0
    %v803 = vadd.f32 %v616, %v802
    %v804 = vpop.f32.mrb[0].mxu0
    %805 = vmatprep.mubr.f32.mxu0 0.0
    %806 = vmatmul.mubr.f32.gmra.mrb[0].mxu0 %v664
    %v807 = vpop.f32.mrb[0].mxu0
    %v808 = vadd.f32 %v616, %v807
    %v809 = vpop.f32.mrb[0].mxu0
    %810 = vdwg.mxu0
    %811 = vmax.xlane.f32.xlu0 %v733
    %v812 = vpop.xlane.xlu0 %811
    %813 = vmax.xlane.f32.xlu0 %v738
    %v814 = vpop.xlane.xlu0 %813
    %815 = vmax.xlane.f32.xlu0 %v743
    %v816 = vpop.xlane.xlu0 %815
    %817 = vmax.xlane.f32.xlu0 %v748
    %v818 = vpop.xlane.xlu0 %817
    %819 = vmax.xlane.f32.xlu0 %v753
    %v820 = vpop.xlane.xlu0 %819
    %821 = vmax.xlane.f32.xlu0 %v758
    %v822 = vpop.xlane.xlu0 %821
    %823 = vmax.xlane.f32.xlu0 %v763
    %v824 = vpop.xlane.xlu0 %823
    %825 = vmax.xlane.f32.xlu0 %v768
    %v826 = vpop.xlane.xlu0 %825
    %827 = vmax.xlane.f32.xlu0 %v773
    %v828 = vpop.xlane.xlu0 %827
    %829 = vmax.xlane.f32.xlu0 %v778
    %v830 = vpop.xlane.xlu0 %829
    %831 = vmax.xlane.f32.xlu0 %v783
    %v832 = vpop.xlane.xlu0 %831
    %833 = vmax.xlane.f32.xlu0 %v788
    %v834 = vpop.xlane.xlu0 %833
    %835 = vmax.xlane.f32.xlu0 %v793
    %v836 = vpop.xlane.xlu0 %835
    %837 = vmax.xlane.f32.xlu0 %v798
    %v838 = vpop.xlane.xlu0 %837
    %839 = vmax.xlane.f32.xlu0 %v803
    %v840 = vpop.xlane.xlu0 %839
    %841 = vmax.xlane.f32.xlu0 %v808
    %v842 = vpop.xlane.xlu0 %841
    %v843 = vsub.f32 %v733, %v812
    %v844 = vsub.f32 %v738, %v814
    %v845 = vsub.f32 %v743, %v816
    %v846 = vsub.f32 %v748, %v818
    %v847 = vsub.f32 %v753, %v820
    %v848 = vsub.f32 %v758, %v822
    %v849 = vsub.f32 %v763, %v824
    %v850 = vsub.f32 %v768, %v826
    %v851 = vsub.f32 %v773, %v828
    %v852 = vsub.f32 %v778, %v830
    %v853 = vsub.f32 %v783, %v832
    %v854 = vsub.f32 %v788, %v834
    %v855 = vsub.f32 %v793, %v836
    %v856 = vsub.f32 %v798, %v838
    %v857 = vsub.f32 %v803, %v840
    %v858 = vsub.f32 %v808, %v842
    %v859 = vmul.f32 %v843, 1.442695
    %v860 = vpow.pop %v859
    %v861 = vmul.f32 %v844, 1.442695
    %v862 = vpow.pop %v861
    %v863 = vmul.f32 %v845, 1.442695
    %v864 = vpow.pop %v863
    %v865 = vmul.f32 %v846, 1.442695
    %v866 = vpow.pop %v865
    %v867 = vmul.f32 %v847, 1.442695
    %v868 = vpow.pop %v867
    %v869 = vmul.f32 %v848, 1.442695
    %v870 = vpow.pop %v869
    %v871 = vmul.f32 %v849, 1.442695
    %v872 = vpow.pop %v871
    %v873 = vmul.f32 %v850, 1.442695
    %v874 = vpow.pop %v873
    %v875 = vmul.f32 %v851, 1.442695
    %v876 = vpow.pop %v875
    %v877 = vmul.f32 %v852, 1.442695
    %v878 = vpow.pop %v877
    %v879 = vmul.f32 %v853, 1.442695
    %v880 = vpow.pop %v879
    %v881 = vmul.f32 %v854, 1.442695
    %v882 = vpow.pop %v881
    %v883 = vmul.f32 %v855, 1.442695
    %v884 = vpow.pop %v883
    %v885 = vmul.f32 %v856, 1.442695
    %v886 = vpow.pop %v885
    %v887 = vmul.f32 %v857, 1.442695
    %v888 = vpow.pop %v887
    %v889 = vmul.f32 %v858, 1.442695
    %v890 = vpow.pop %v889
    %891 = vadd.xlane.f32.xlu0 %v860
    %v892 = vpop.xlane.xlu0 %891
    %893 = vadd.xlane.f32.xlu0 %v862
    %v894 = vpop.xlane.xlu0 %893
    %895 = vadd.xlane.f32.xlu0 %v864
    %v896 = vpop.xlane.xlu0 %895
    %897 = vadd.xlane.f32.xlu0 %v866
    %v898 = vpop.xlane.xlu0 %897
    %899 = vadd.xlane.f32.xlu0 %v868
    %v900 = vpop.xlane.xlu0 %899
    %901 = vadd.xlane.f32.xlu0 %v870
    %v902 = vpop.xlane.xlu0 %901
    %903 = vadd.xlane.f32.xlu0 %v872
    %v904 = vpop.xlane.xlu0 %903
    %905 = vadd.xlane.f32.xlu0 %v874
    %v906 = vpop.xlane.xlu0 %905
    %907 = vadd.xlane.f32.xlu0 %v876
    %v908 = vpop.xlane.xlu0 %907
    %909 = vadd.xlane.f32.xlu0 %v878
    %v910 = vpop.xlane.xlu0 %909
    %911 = vadd.xlane.f32.xlu0 %v880
    %v912 = vpop.xlane.xlu0 %911
    %913 = vadd.xlane.f32.xlu0 %v882
    %v914 = vpop.xlane.xlu0 %913
    %915 = vadd.xlane.f32.xlu0 %v884
    %v916 = vpop.xlane.xlu0 %915
    %917 = vadd.xlane.f32.xlu0 %v886
    %v918 = vpop.xlane.xlu0 %917
    %919 = vadd.xlane.f32.xlu0 %v888
    %v920 = vpop.xlane.xlu0 %919
    %921 = vadd.xlane.f32.xlu0 %v890
    %v922 = vpop.xlane.xlu0 %921
    %v923 = vrcp.pop %v892
    %v924 = vrcp.pop %v894
    %v925 = vrcp.pop %v896
    %v926 = vrcp.pop %v898
    %v927 = vrcp.pop %v900
    %v928 = vrcp.pop %v902
    %v929 = vrcp.pop %v904
    %v930 = vrcp.pop %v906
    %v931 = vrcp.pop %v908
    %v932 = vrcp.pop %v910
    %v933 = vrcp.pop %v912
    %v934 = vrcp.pop %v914
    %v935 = vrcp.pop %v916
    %v936 = vrcp.pop %v918
    %v937 = vrcp.pop %v920
    %v938 = vrcp.pop %v922
    %v939 = vmul.f32 %v860, %v923
    %v940 = vmul.f32 %v862, %v924
    %v941 = vmul.f32 %v864, %v925
    %v942 = vmul.f32 %v866, %v926
    %v943 = vmul.f32 %v868, %v927
    %v944 = vmul.f32 %v870, %v928
    %v945 = vmul.f32 %v872, %v929
    %v946 = vmul.f32 %v874, %v930
    %v947 = vmul.f32 %v876, %v931
    %v948 = vmul.f32 %v878, %v932
    %v949 = vmul.f32 %v880, %v933
    %v950 = vmul.f32 %v882, %v934
    %v951 = vmul.f32 %v884, %v935
    %v952 = vmul.f32 %v886, %v936
    %v953 = vmul.f32 %v888, %v937
    %v954 = vmul.f32 %v890, %v938
    %955 = vst.msk [vmem:[%s6] sm:$0xff] %vm271, %v576
    %956 = vst.msk [vmem:[%s6 + $0x8] sm:$0xff] %vm271, %v578
    %957 = vst.msk [vmem:[%s6 + $0x10] sm:$0xff] %vm271, %v580
    %958 = vst.msk [vmem:[%s6 + $0x18] sm:$0xff] %vm271, %v582
    %959 = vst.msk [vmem:[%s6 + $0x20] sm:$0xff] %vm271, %v584
    %960 = vst.msk [vmem:[%s6 + $0x28] sm:$0xff] %vm271, %v586
    %961 = vst.msk [vmem:[%s6 + $0x30] sm:$0xff] %vm271, %v588
    %962 = vst.msk [vmem:[%s6 + $0x38] sm:$0xff] %vm271, %v590
    %963 = vst.msk [vmem:[%s6 + $0x40] sm:$0xff] %vm271, %v592
    %964 = vst.msk [vmem:[%s6 + $0x48] sm:$0xff] %vm271, %v594
    %965 = vst.msk [vmem:[%s6 + $0x50] sm:$0xff] %vm271, %v596
    %966 = vst.msk [vmem:[%s6 + $0x58] sm:$0xff] %vm271, %v598
    %967 = vst.msk [vmem:[%s6 + $0x60] sm:$0xff] %vm271, %v600
    %968 = vst.msk [vmem:[%s6 + $0x68] sm:$0xff] %vm271, %v602
    %969 = vst.msk [vmem:[%s6 + $0x70] sm:$0xff] %vm271, %v604
    %970 = vst.msk [vmem:[%s6 + $0x78] sm:$0xff] %vm271, %v606
    %971 = vst [vmem:[%s7] sm:$0xff] %v939
    %972 = vst [vmem:[%s7 + $0x8] sm:$0xff] %v940
    %973 = vst [vmem:[%s7 + $0x10] sm:$0xff] %v941
    %974 = vst [vmem:[%s7 + $0x18] sm:$0xff] %v942
    %975 = vst [vmem:[%s7 + $0x20] sm:$0xff] %v943
    %976 = vst [vmem:[%s7 + $0x28] sm:$0xff] %v944
    %977 = vst [vmem:[%s7 + $0x30] sm:$0xff] %v945
    %978 = vst [vmem:[%s7 + $0x38] sm:$0xff] %v946
    %979 = vst [vmem:[%s7 + $0x40] sm:$0xff] %v947
    %980 = vst [vmem:[%s7 + $0x48] sm:$0xff] %v948
    %981 = vst [vmem:[%s7 + $0x50] sm:$0xff] %v949
    %982 = vst [vmem:[%s7 + $0x58] sm:$0xff] %v950
    %983 = vst [vmem:[%s7 + $0x60] sm:$0xff] %v951
    %984 = vst [vmem:[%s7 + $0x68] sm:$0xff] %v952
    %985 = vst [vmem:[%s7 + $0x70] sm:$0xff] %v953
    %986 = vst [vmem:[%s7 + $0x78] sm:$0xff] %v954
  $region33: #{neural_fp.3} parent=0 // pred_fallthru
    _
  // Predicated region
  $region34: #{neural_fp.3} parent=0 // pred_check
    _
  $region35: #{neural_fp.3} parent=0 // pred_check_branch
    %988 = sbr.rel (0) target = $region37
  $region36: #{neural_fp.3} parent=0 // pred_region
    _
  $region37: #{neural_fp.3} parent=0 // pred_fallthru
    _
  // Predicated region
  $region38: #{neural_fp.3} parent=0 // pred_check
    _
  $region39: #{neural_fp.3} parent=0 // pred_check_branch
    %990 = sbr.rel (0) target = $region41
  $region40: #{neural_fp.3} parent=0 // pred_region
    _
  $region41: #{neural_fp.3} parent=0 // pred_fallthru
    _
  // Predicated region
  $region42: #{neural_fp.3} parent=0 // pred_check
    _
  $region43: #{neural_fp.3} parent=0 // pred_check_branch
    %992 = sbr.rel (0) target = $region45
  $region44: #{neural_fp.3} parent=0 // pred_region
    _
  $region45: #{neural_fp.3} parent=0 // pred_fallthru
    _
  // Predicated region
  $region46: #{neural_fp.3} parent=0 // pred_check
    _
  $region47: #{neural_fp.3} parent=0 // pred_check_branch
    %994 = sbr.rel (0) target = $region49
  $region48: #{neural_fp.3} parent=0 // pred_region
    _
  $region49: #{neural_fp.3} parent=0 // pred_fallthru
    _

// kernel: neural_fp.4
$region0: #{neural_fp.4}
  #allocation0 [shape = 'u32[]', space=smem, size = 0x4, offset = 0x4, fixed_abs, tag = 'smem constant byte address 0x4 - core index']
  #allocation1 [shape = 'u32[144,128]{1,0:T(1,128)}', space=vmem, size = 0x12000, scoped, tag = 'internal scratch']
  #allocation2 [shape = 'f32[128,32]{1,0:T(8,128)}', space=vmem, size = 0x10000, scoped, tag = 'scratch operand']
  %s0 = inlined_call_operand.vmem [shape: bf16[128,128], index: 0, kind: input, shape index: {}]
  %s1 = inlined_call_operand.vmem [shape: f32[128,32], index: 1, kind: input, shape index: {}]
  %s2 = inlined_call_operand.vmem [shape: f32[32,32], index: 2, kind: input, shape index: {}]
  %s3 = inlined_call_operand.vmem [shape: f32[1,32], index: 3, kind: input, shape index: {}]
  %s4 = inlined_call_operand.vmem [shape: f32[32,128], index: 4, kind: input, shape index: {}]
  %s5 = inlined_call_operand.vmem [shape: f32[1,128], index: 5, kind: input, shape index: {}]
  %s6 = inlined_call_operand.hbm [shape: f32[128,32], index: 6, kind: output, shape index: {0}]
  %s7 = inlined_call_operand.vmem [shape: f32[128,128], index: 7, kind: output, shape index: {1}]
  %8 = xla_tuple %s6, %s7
  %s9 = sld [smem:[#allocation0]]
  $region50: #{neural_fp.4} parent=0
    _
  %s11 = ssub.s32 1, %s9
  %s12 = scalar_select 0, %s11, %s9
  $region1: #{neural_fp.4} parent=0
    #allocation3 [shape = 'u8[65536]{0}', space=vmem, size = 0x10000, scoped, tag = 'output window, operand 0, single buffered']
    #allocation4 [shape = 's32[1]{0}', space=sflag, size = 0x4, scoped, tag = 'scoped memory for neural_fp.4']
    %13 = vsyncpa [#allocation4], 0
    // Predicated region
    $region2: #{neural_fp.4} parent=1 // pred_check
      _
    $region3: #{neural_fp.4} parent=1 // pred_check_branch
      %15 = sbr.rel (0) target = $region5
    $region4: #{neural_fp.4} parent=1 // pred_region
      _
    $region5: #{neural_fp.4} parent=1 // pred_fallthru
      _
    // Predicated region
    $region6: #{neural_fp.4} parent=1 // pred_check
      _
    $region7: #{neural_fp.4} parent=1 // pred_check_branch
      %17 = sbr.rel (0) target = $region9
    $region8: #{neural_fp.4} parent=1 // pred_region
      _
    $region9: #{neural_fp.4} parent=1 // pred_fallthru
      _
    // Predicated region
    $region10: #{neural_fp.4} parent=1 // pred_check
      _
    $region11: #{neural_fp.4} parent=1 // pred_check_branch
      %19 = sbr.rel (0) target = $region13
    $region12: #{neural_fp.4} parent=1 // pred_region
      _
    $region13: #{neural_fp.4} parent=1 // pred_fallthru
      _
    // Predicated region
    $region14: #{neural_fp.4} parent=1 // pred_check
      _
    $region15: #{neural_fp.4} parent=1 // pred_check_branch
      %21 = sbr.rel (0) target = $region17
    $region16: #{neural_fp.4} parent=1 // pred_region
      _
    $region17: #{neural_fp.4} parent=1 // pred_fallthru
      _
    // Predicated region
    $region18: #{neural_fp.4} parent=1 // pred_check
      _
    $region19: #{neural_fp.4} parent=1 // pred_check_branch
      %23 = sbr.rel (0) target = $region21
    $region20: #{neural_fp.4} parent=1 // pred_region
      _
    $region21: #{neural_fp.4} parent=1 // pred_fallthru
      _
    // Predicated region
    $region22: #{neural_fp.4} parent=1 // pred_check
      _
    $region23: #{neural_fp.4} parent=1 // pred_check_branch
      %25 = sbr.rel (0) target = $region25
    $region24: #{neural_fp.4} parent=1 // pred_region
      _
    $region25: #{neural_fp.4} parent=1 // pred_fallthru
      _
    %p26 = scmp.eq.s32.totalorder 0, 0
    // Predicated region
    $region26: #{neural_fp.4} parent=1 // pred_check
      %p27 = pneg %p26
    $region27: #{neural_fp.4} parent=1 // pred_check_branch
      %29 = sbr.rel (%p27) target = $region29
    $region28: #{neural_fp.4} parent=1 // pred_region
      %vm30 = vcmask 261120
      %31 = vst.msk [vmem:[#allocation2] sm:$0xff] %vm30, 0.0
      %32 = vst.msk [vmem:[#allocation2 + $0x8] sm:$0xff] %vm30, 0.0
      %33 = vst.msk [vmem:[#allocation2 + $0x10] sm:$0xff] %vm30, 0.0
      %34 = vst.msk [vmem:[#allocation2 + $0x18] sm:$0xff] %vm30, 0.0
      %35 = vst.msk [vmem:[#allocation2 + $0x20] sm:$0xff] %vm30, 0.0
      %36 = vst.msk [vmem:[#allocation2 + $0x28] sm:$0xff] %vm30, 0.0
      %37 = vst.msk [vmem:[#allocation2 + $0x30] sm:$0xff] %vm30, 0.0
      %38 = vst.msk [vmem:[#allocation2 + $0x38] sm:$0xff] %vm30, 0.0
      %39 = vst.msk [vmem:[#allocation2 + $0x40] sm:$0xff] %vm30, 0.0
      %40 = vst.msk [vmem:[#allocation2 + $0x48] sm:$0xff] %vm30, 0.0
      %41 = vst.msk [vmem:[#allocation2 + $0x50] sm:$0xff] %vm30, 0.0
      %42 = vst.msk [vmem:[#allocation2 + $0x58] sm:$0xff] %vm30, 0.0
      %43 = vst.msk [vmem:[#allocation2 + $0x60] sm:$0xff] %vm30, 0.0
      %44 = vst.msk [vmem:[#allocation2 + $0x68] sm:$0xff] %vm30, 0.0
      %45 = vst.msk [vmem:[#allocation2 + $0x70] sm:$0xff] %vm30, 0.0
      %46 = vst.msk [vmem:[#allocation2 + $0x78] sm:$0xff] %vm30, 0.0
    $region29: #{neural_fp.4} parent=1 // pred_fallthru
      _
    %v47 = vld [vmem:[%s0] sm:$0xf]
    %v48 = vld [vmem:[%s0 + $0x4] sm:$0xf]
    %v49 = vld [vmem:[%s0 + $0x8] sm:$0xf]
    %v50 = vld [vmem:[%s0 + $0xc] sm:$0xf]
    %v51 = vld [vmem:[%s0 + $0x10] sm:$0xf]
    %v52 = vld [vmem:[%s0 + $0x14] sm:$0xf]
    %v53 = vld [vmem:[%s0 + $0x18] sm:$0xf]
    %v54 = vld [vmem:[%s0 + $0x1c] sm:$0xf]
    %v55 = vld [vmem:[%s0 + $0x20] sm:$0xf]
    %v56 = vld [vmem:[%s0 + $0x24] sm:$0xf]
    %v57 = vld [vmem:[%s0 + $0x28] sm:$0xf]
    %v58 = vld [vmem:[%s0 + $0x2c] sm:$0xf]
    %v59 = vld [vmem:[%s0 + $0x30] sm:$0xf]
    %v60 = vld [vmem:[%s0 + $0x34] sm:$0xf]
    %v61 = vld [vmem:[%s0 + $0x38] sm:$0xf]
    %v62 = vld [vmem:[%s0 + $0x3c] sm:$0xf]
    %v63 = vunpack.c.l.bf16 %v47
    %v64 = vunpack.c.l.bf16 %v48
    %v65 = vunpack.c.l.bf16 %v49
    %v66 = vunpack.c.l.bf16 %v50
    %v67 = vunpack.c.l.bf16 %v51
    %v68 = vunpack.c.l.bf16 %v52
    %v69 = vunpack.c.l.bf16 %v53
    %v70 = vunpack.c.l.bf16 %v54
    %v71 = vunpack.c.l.bf16 %v55
    %v72 = vunpack.c.l.bf16 %v56
    %v73 = vunpack.c.l.bf16 %v57
    %v74 = vunpack.c.l.bf16 %v58
    %v75 = vunpack.c.l.bf16 %v59
    %v76 = vunpack.c.l.bf16 %v60
    %v77 = vunpack.c.l.bf16 %v61
    %v78 = vunpack.c.l.bf16 %v62
    %v79 = vld [vmem:[#allocation2] sm:$0xff]
    %v80 = vld [vmem:[#allocation2 + $0x8] sm:$0xff]
    %v81 = vld [vmem:[#allocation2 + $0x10] sm:$0xff]
    %v82 = vld [vmem:[#allocation2 + $0x18] sm:$0xff]
    %v83 = vld [vmem:[#allocation2 + $0x20] sm:$0xff]
    %v84 = vld [vmem:[#allocation2 + $0x28] sm:$0xff]
    %v85 = vld [vmem:[#allocation2 + $0x30] sm:$0xff]
    %v86 = vld [vmem:[#allocation2 + $0x38] sm:$0xff]
    %v87 = vld [vmem:[#allocation2 + $0x40] sm:$0xff]
    %v88 = vld [vmem:[#allocation2 + $0x48] sm:$0xff]
    %v89 = vld [vmem:[#allocation2 + $0x50] sm:$0xff]
    %v90 = vld [vmem:[#allocation2 + $0x58] sm:$0xff]
    %v91 = vld [vmem:[#allocation2 + $0x60] sm:$0xff]
    %v92 = vld [vmem:[#allocation2 + $0x68] sm:$0xff]
    %v93 = vld [vmem:[#allocation2 + $0x70] sm:$0xff]
    %v94 = vld [vmem:[#allocation2 + $0x78] sm:$0xff]
    %v95 = vld [vmem:[%s1] sm:$0xff]
    %v96 = vld [vmem:[%s1 + $0x8] sm:$0xff]
    %v97 = vld [vmem:[%s1 + $0x10] sm:$0xff]
    %v98 = vld [vmem:[%s1 + $0x18] sm:$0xff]
    %v99 = vld [vmem:[%s1 + $0x20] sm:$0xff]
    %v100 = vld [vmem:[%s1 + $0x28] sm:$0xff]
    %v101 = vld [vmem:[%s1 + $0x30] sm:$0xff]
    %v102 = vld [vmem:[%s1 + $0x38] sm:$0xff]
    %v103 = vld [vmem:[%s1 + $0x40] sm:$0xff]
    %v104 = vld [vmem:[%s1 + $0x48] sm:$0xff]
    %v105 = vld [vmem:[%s1 + $0x50] sm:$0xff]
    %v106 = vld [vmem:[%s1 + $0x58] sm:$0xff]
    %v107 = vld [vmem:[%s1 + $0x60] sm:$0xff]
    %v108 = vld [vmem:[%s1 + $0x68] sm:$0xff]
    %v109 = vld [vmem:[%s1 + $0x70] sm:$0xff]
    %v110 = vld [vmem:[%s1 + $0x78] sm:$0xff]
    %111 = vmatprep.subr.mxu0 0.0
    %112 = vmatpush1.msra.mxu0 %v95
    %113 = vmatprep.subr.mxu0 0.0
    %114 = vmatpush1.msra.mxu0 %v96
    %115 = vmatprep.subr.mxu0 0.0
    %116 = vmatpush1.msra.mxu0 %v97
    %117 = vmatprep.subr.mxu0 0.0
    %118 = vmatpush1.msra.mxu0 %v98
    %119 = vmatprep.subr.mxu0 0.0
    %120 = vmatpush1.msra.mxu0 %v99
    %121 = vmatprep.subr.mxu0 0.0
    %122 = vmatpush1.msra.mxu0 %v100
    %123 = vmatprep.subr.mxu0 0.0
    %124 = vmatpush1.msra.mxu0 %v101
    %125 = vmatprep.subr.mxu0 0.0
    %126 = vmatpush1.msra.mxu0 %v102
    %127 = vmatprep.subr.mxu0 0.0
    %128 = vmatpush1.msra.mxu0 %v103
    %129 = vmatprep.subr.mxu0 0.0
    %130 = vmatpush1.msra.mxu0 %v104
    %131 = vmatprep.subr.mxu0 0.0
    %132 = vmatpush1.msra.mxu0 %v105
    %133 = vmatprep.subr.mxu0 0.0
    %134 = vmatpush1.msra.mxu0 %v106
    %135 = vmatprep.subr.mxu0 0.0
    %136 = vmatpush1.msra.mxu0 %v107
    %137 = vmatprep.subr.mxu0 0.0
    %138 = vmatpush1.msra.mxu0 %v108
    %139 = vmatprep.subr.mxu0 0.0
    %140 = vmatpush1.msra.mxu0 %v109
    %141 = vmatprep.subr.mxu0 0.0
    %142 = vmatpush1.msra.mxu0 %v110
    %143 = vmatprep.subr.mxu0 0.0
    %144 = vmatpush1.msra.mxu0 0.0
    %145 = vmatprep.subr.mxu0 0.0
    %146 = vmatpush1.msra.mxu0 0.0
    %147 = vmatprep.subr.mxu0 0.0
    %148 = vmatpush1.msra.mxu0 0.0
    %149 = vmatprep.subr.mxu0 0.0
    %150 = vmatpush1.msra.mxu0 0.0
    %151 = vmatprep.subr.mxu0 0.0
    %152 = vmatpush1.msra.mxu0 0.0
    %153 = vmatprep.subr.mxu0 0.0
    %154 = vmatpush1.msra.mxu0 0.0
    %155 = vmatprep.subr.mxu0 0.0
    %156 = vmatpush1.msra.mxu0 0.0
    %157 = vmatprep.subr.mxu0 0.0
    %158 = vmatpush1.msra.mxu0 0.0
    %159 = vmatprep.subr.mxu0 0.0
    %160 = vmatpush1.msra.mxu0 0.0
    %161 = vmatprep.subr.mxu0 0.0
    %162 = vmatpush1.msra.mxu0 0.0
    %163 = vmatprep.subr.mxu0 0.0
    %164 = vmatpush1.msra.mxu0 0.0
    %165 = vmatprep.subr.mxu0 0.0
    %166 = vmatpush1.msra.mxu0 0.0
    %167 = vmatprep.subr.mxu0 0.0
    %168 = vmatpush1.msra.mxu0 0.0
    %169 = vmatprep.subr.mxu0 0.0
    %170 = vmatpush1.msra.mxu0 0.0
    %171 = vmatprep.subr.mxu0 0.0
    %172 = vmatpush1.msra.mxu0 0.0
    %173 = vmatprep.subr.mxu0 0.0
    %174 = vmatpush1.msra.mxu0 0.0
    %175 = vmatprep.mubr.f32.mxu0 0.0
    %176 = vmatmul.mubr.f32.gmra.mrb[0].mxu0 %v63
    %v177 = vpop.f32.mrb[0].mxu0
    %v178 = vadd.f32 0.0, %v177
    %v179 = vpop.f32.mrb[0].mxu0
    %180 = vmatprep.mubr.f32.mxu0 0.0
    %181 = vmatmul.mubr.f32.gmra.mrb[0].mxu0 %v64
    %v182 = vpop.f32.mrb[0].mxu0
    %v183 = vadd.f32 0.0, %v182
    %v184 = vpop.f32.mrb[0].mxu0
    %185 = vmatprep.mubr.f32.mxu0 0.0
    %186 = vmatmul.mubr.f32.gmra.mrb[0].mxu0 %v65
    %v187 = vpop.f32.mrb[0].mxu0
    %v188 = vadd.f32 0.0, %v187
    %v189 = vpop.f32.mrb[0].mxu0
    %190 = vmatprep.mubr.f32.mxu0 0.0
    %191 = vmatmul.mubr.f32.gmra.mrb[0].mxu0 %v66
    %v192 = vpop.f32.mrb[0].mxu0
    %v193 = vadd.f32 0.0, %v192
    %v194 = vpop.f32.mrb[0].mxu0
    %195 = vmatprep.mubr.f32.mxu0 0.0
    %196 = vmatmul.mubr.f32.gmra.mrb[0].mxu0 %v67
    %v197 = vpop.f32.mrb[0].mxu0
    %v198 = vadd.f32 0.0, %v197
    %v199 = vpop.f32.mrb[0].mxu0
    %200 = vmatprep.mubr.f32.mxu0 0.0
    %201 = vmatmul.mubr.f32.gmra.mrb[0].mxu0 %v68
    %v202 = vpop.f32.mrb[0].mxu0
    %v203 = vadd.f32 0.0, %v202
    %v204 = vpop.f32.mrb[0].mxu0
    %205 = vmatprep.mubr.f32.mxu0 0.0
    %206 = vmatmul.mubr.f32.gmra.mrb[0].mxu0 %v69
    %v207 = vpop.f32.mrb[0].mxu0
    %v208 = vadd.f32 0.0, %v207
    %v209 = vpop.f32.mrb[0].mxu0
    %210 = vmatprep.mubr.f32.mxu0 0.0
    %211 = vmatmul.mubr.f32.gmra.mrb[0].mxu0 %v70
    %v212 = vpop.f32.mrb[0].mxu0
    %v213 = vadd.f32 0.0, %v212
    %v214 = vpop.f32.mrb[0].mxu0
    %215 = vmatprep.mubr.f32.mxu0 0.0
    %216 = vmatmul.mubr.f32.gmra.mrb[0].mxu0 %v71
    %v217 = vpop.f32.mrb[0].mxu0
    %v218 = vadd.f32 0.0, %v217
    %v219 = vpop.f32.mrb[0].mxu0
    %220 = vmatprep.mubr.f32.mxu0 0.0
    %221 = vmatmul.mubr.f32.gmra.mrb[0].mxu0 %v72
    %v222 = vpop.f32.mrb[0].mxu0
    %v223 = vadd.f32 0.0, %v222
    %v224 = vpop.f32.mrb[0].mxu0
    %225 = vmatprep.mubr.f32.mxu0 0.0
    %226 = vmatmul.mubr.f32.gmra.mrb[0].mxu0 %v73
    %v227 = vpop.f32.mrb[0].mxu0
    %v228 = vadd.f32 0.0, %v227
    %v229 = vpop.f32.mrb[0].mxu0
    %230 = vmatprep.mubr.f32.mxu0 0.0
    %231 = vmatmul.mubr.f32.gmra.mrb[0].mxu0 %v74
    %v232 = vpop.f32.mrb[0].mxu0
    %v233 = vadd.f32 0.0, %v232
    %v234 = vpop.f32.mrb[0].mxu0
    %235 = vmatprep.mubr.f32.mxu0 0.0
    %236 = vmatmul.mubr.f32.gmra.mrb[0].mxu0 %v75
    %v237 = vpop.f32.mrb[0].mxu0
    %v238 = vadd.f32 0.0, %v237
    %v239 = vpop.f32.mrb[0].mxu0
    %240 = vmatprep.mubr.f32.mxu0 0.0
    %241 = vmatmul.mubr.f32.gmra.mrb[0].mxu0 %v76
    %v242 = vpop.f32.mrb[0].mxu0
    %v243 = vadd.f32 0.0, %v242
    %v244 = vpop.f32.mrb[0].mxu0
    %245 = vmatprep.mubr.f32.mxu0 0.0
    %246 = vmatmul.mubr.f32.gmra.mrb[0].mxu0 %v77
    %v247 = vpop.f32.mrb[0].mxu0
    %v248 = vadd.f32 0.0, %v247
    %v249 = vpop.f32.mrb[0].mxu0
    %250 = vmatprep.mubr.f32.mxu0 0.0
    %251 = vmatmul.mubr.f32.gmra.mrb[0].mxu0 %v78
    %v252 = vpop.f32.mrb[0].mxu0
    %v253 = vadd.f32 0.0, %v252
    %v254 = vpop.f32.mrb[0].mxu0
    %255 = vdwg.mxu0
    %v256 = vadd.f32 %v79, %v178
    %v257 = vadd.f32 %v80, %v183
    %v258 = vadd.f32 %v81, %v188
    %v259 = vadd.f32 %v82, %v193
    %v260 = vadd.f32 %v83, %v198
    %v261 = vadd.f32 %v84, %v203
    %v262 = vadd.f32 %v85, %v208
    %v263 = vadd.f32 %v86, %v213
    %v264 = vadd.f32 %v87, %v218
    %v265 = vadd.f32 %v88, %v223
    %v266 = vadd.f32 %v89, %v228
    %v267 = vadd.f32 %v90, %v233
    %v268 = vadd.f32 %v91, %v238
    %v269 = vadd.f32 %v92, %v243
    %v270 = vadd.f32 %v93, %v248
    %v271 = vadd.f32 %v94, %v253
    %vm272 = vcmask 261120
    %273 = vst.msk [vmem:[#allocation2] sm:$0xff] %vm272, %v256
    %274 = vst.msk [vmem:[#allocation2 + $0x8] sm:$0xff] %vm272, %v257
    %275 = vst.msk [vmem:[#allocation2 + $0x10] sm:$0xff] %vm272, %v258
    %276 = vst.msk [vmem:[#allocation2 + $0x18] sm:$0xff] %vm272, %v259
    %277 = vst.msk [vmem:[#allocation2 + $0x20] sm:$0xff] %vm272, %v260
    %278 = vst.msk [vmem:[#allocation2 + $0x28] sm:$0xff] %vm272, %v261
    %279 = vst.msk [vmem:[#allocation2 + $0x30] sm:$0xff] %vm272, %v262
    %280 = vst.msk [vmem:[#allocation2 + $0x38] sm:$0xff] %vm272, %v263
    %281 = vst.msk [vmem:[#allocation2 + $0x40] sm:$0xff] %vm272, %v264
    %282 = vst.msk [vmem:[#allocation2 + $0x48] sm:$0xff] %vm272, %v265
    %283 = vst.msk [vmem:[#allocation2 + $0x50] sm:$0xff] %vm272, %v266
    %284 = vst.msk [vmem:[#allocation2 + $0x58] sm:$0xff] %vm272, %v267
    %285 = vst.msk [vmem:[#allocation2 + $0x60] sm:$0xff] %vm272, %v268
    %286 = vst.msk [vmem:[#allocation2 + $0x68] sm:$0xff] %vm272, %v269
    %287 = vst.msk [vmem:[#allocation2 + $0x70] sm:$0xff] %vm272, %v270
    %288 = vst.msk [vmem:[#allocation2 + $0x78] sm:$0xff] %vm272, %v271
    // Predicated region
    $region30: #{neural_fp.4} parent=1 // pred_check
      %p289 = pneg %p26
    $region31: #{neural_fp.4} parent=1 // pred_check_branch
      %291 = sbr.rel (%p289) target = $region33
    $region32: #{neural_fp.4} parent=1 // pred_region
      %v292 = vld [vmem:[#allocation2] sm:$0xff]
      %v293 = vld [vmem:[#allocation2 + $0x8] sm:$0xff]
      %v294 = vld [vmem:[#allocation2 + $0x10] sm:$0xff]
      %v295 = vld [vmem:[#allocation2 + $0x18] sm:$0xff]
      %v296 = vld [vmem:[#allocation2 + $0x20] sm:$0xff]
      %v297 = vld [vmem:[#allocation2 + $0x28] sm:$0xff]
      %v298 = vld [vmem:[#allocation2 + $0x30] sm:$0xff]
      %v299 = vld [vmem:[#allocation2 + $0x38] sm:$0xff]
      %v300 = vld [vmem:[#allocation2 + $0x40] sm:$0xff]
      %v301 = vld [vmem:[#allocation2 + $0x48] sm:$0xff]
      %v302 = vld [vmem:[#allocation2 + $0x50] sm:$0xff]
      %v303 = vld [vmem:[#allocation2 + $0x58] sm:$0xff]
      %v304 = vld [vmem:[#allocation2 + $0x60] sm:$0xff]
      %v305 = vld [vmem:[#allocation2 + $0x68] sm:$0xff]
      %v306 = vld [vmem:[#allocation2 + $0x70] sm:$0xff]
      %v307 = vld [vmem:[#allocation2 + $0x78] sm:$0xff]
      %v308 = vld [vmem:[%s2] sm:$0xff]
      %v309 = vld [vmem:[%s2 + $0x8] sm:$0xff]
      %v310 = vld [vmem:[%s2 + $0x10] sm:$0xff]
      %v311 = vld [vmem:[%s2 + $0x18] sm:$0xff]
      %v312 = vld [vmem:[%s3] sm:$0x1]
      %v314 = vlaneseq
      %v315 = vshrl.u32 %v314, 7
      %v316 = vsub.s32 0, %v315
      %v317 = vrot.slane %v312, %v316
      %v320 = vsel %vm272, %v292, 0
      %v323 = vsel %vm272, %v293, 0
      %v326 = vsel %vm272, %v294, 0
      %v329 = vsel %vm272, %v295, 0
      %v332 = vsel %vm272, %v296, 0
      %v335 = vsel %vm272, %v297, 0
      %v338 = vsel %vm272, %v298, 0
      %v341 = vsel %vm272, %v299, 0
      %v344 = vsel %vm272, %v300, 0
      %v347 = vsel %vm272, %v301, 0
      %v350 = vsel %vm272, %v302, 0
      %v353 = vsel %vm272, %v303, 0
      %v356 = vsel %vm272, %v304, 0
      %v359 = vsel %vm272, %v305, 0
      %v362 = vsel %vm272, %v306, 0
      %v365 = vsel %vm272, %v307, 0
      %367 = vmatprep.subr.mxu0 0.0
      %368 = vmatpush1.msra.mxu0 %v308
      %369 = vmatprep.subr.mxu0 0.0
      %370 = vmatpush1.msra.mxu0 %v309
      %371 = vmatprep.subr.mxu0 0.0
      %372 = vmatpush1.msra.mxu0 %v310
      %373 = vmatprep.subr.mxu0 0.0
      %374 = vmatpush1.msra.mxu0 %v311
      %375 = vmatprep.subr.mxu0 0.0
      %376 = vmatpush1.msra.mxu0 0.0
      %377 = vmatprep.subr.mxu0 0.0
      %378 = vmatpush1.msra.mxu0 0.0
      %379 = vmatprep.subr.mxu0 0.0
      %380 = vmatpush1.msra.mxu0 0.0
      %381 = vmatprep.subr.mxu0 0.0
      %382 = vmatpush1.msra.mxu0 0.0
      %383 = vmatprep.subr.mxu0 0.0
      %384 = vmatpush1.msra.mxu0 0.0
      %385 = vmatprep.subr.mxu0 0.0
      %386 = vmatpush1.msra.mxu0 0.0
      %387 = vmatprep.subr.mxu0 0.0
      %388 = vmatpush1.msra.mxu0 0.0
      %389 = vmatprep.subr.mxu0 0.0
      %390 = vmatpush1.msra.mxu0 0.0
      %391 = vmatprep.subr.mxu0 0.0
      %392 = vmatpush1.msra.mxu0 0.0
      %393 = vmatprep.subr.mxu0 0.0
      %394 = vmatpush1.msra.mxu0 0.0
      %395 = vmatprep.subr.mxu0 0.0
      %396 = vmatpush1.msra.mxu0 0.0
      %397 = vmatprep.subr.mxu0 0.0
      %398 = vmatpush1.msra.mxu0 0.0
      %399 = vmatprep.subr.mxu0 0.0
      %400 = vmatpush1.msra.mxu0 0.0
      %401 = vmatprep.subr.mxu0 0.0
      %402 = vmatpush1.msra.mxu0 0.0
      %403 = vmatprep.subr.mxu0 0.0
      %404 = vmatpush1.msra.mxu0 0.0
      %405 = vmatprep.subr.mxu0 0.0
      %406 = vmatpush1.msra.mxu0 0.0
      %407 = vmatprep.subr.mxu0 0.0
      %408 = vmatpush1.msra.mxu0 0.0
      %409 = vmatprep.subr.mxu0 0.0
      %410 = vmatpush1.msra.mxu0 0.0
      %411 = vmatprep.subr.mxu0 0.0
      %412 = vmatpush1.msra.mxu0 0.0
      %413 = vmatprep.subr.mxu0 0.0
      %414 = vmatpush1.msra.mxu0 0.0
      %415 = vmatprep.subr.mxu0 0.0
      %416 = vmatpush1.msra.mxu0 0.0
      %417 = vmatprep.subr.mxu0 0.0
      %418 = vmatpush1.msra.mxu0 0.0
      %419 = vmatprep.subr.mxu0 0.0
      %420 = vmatpush1.msra.mxu0 0.0
      %421 = vmatprep.subr.mxu0 0.0
      %422 = vmatpush1.msra.mxu0 0.0
      %423 = vmatprep.subr.mxu0 0.0
      %424 = vmatpush1.msra.mxu0 0.0
      %425 = vmatprep.subr.mxu0 0.0
      %426 = vmatpush1.msra.mxu0 0.0
      %427 = vmatprep.subr.mxu0 0.0
      %428 = vmatpush1.msra.mxu0 0.0
      %429 = vmatprep.subr.mxu0 0.0
      %430 = vmatpush1.msra.mxu0 0.0
      %431 = vmatprep.mubr.f32.mxu0 0.0
      %432 = vmatmul.mubr.f32.gmra.mrb[0].mxu0 %v320
      %v433 = vpop.f32.mrb[0].mxu0
      %v434 = vadd.f32 %v317, %v433
      %v435 = vpop.f32.mrb[0].mxu0
      %436 = vmatprep.mubr.f32.mxu0 0.0
      %437 = vmatmul.mubr.f32.gmra.mrb[0].mxu0 %v323
      %v438 = vpop.f32.mrb[0].mxu0
      %v439 = vadd.f32 %v317, %v438
      %v440 = vpop.f32.mrb[0].mxu0
      %441 = vmatprep.mubr.f32.mxu0 0.0
      %442 = vmatmul.mubr.f32.gmra.mrb[0].mxu0 %v326
      %v443 = vpop.f32.mrb[0].mxu0
      %v444 = vadd.f32 %v317, %v443
      %v445 = vpop.f32.mrb[0].mxu0
      %446 = vmatprep.mubr.f32.mxu0 0.0
      %447 = vmatmul.mubr.f32.gmra.mrb[0].mxu0 %v329
      %v448 = vpop.f32.mrb[0].mxu0
      %v449 = vadd.f32 %v317, %v448
      %v450 = vpop.f32.mrb[0].mxu0
      %451 = vmatprep.mubr.f32.mxu0 0.0
      %452 = vmatmul.mubr.f32.gmra.mrb[0].mxu0 %v332
      %v453 = vpop.f32.mrb[0].mxu0
      %v454 = vadd.f32 %v317, %v453
      %v455 = vpop.f32.mrb[0].mxu0
      %456 = vmatprep.mubr.f32.mxu0 0.0
      %457 = vmatmul.mubr.f32.gmra.mrb[0].mxu0 %v335
      %v458 = vpop.f32.mrb[0].mxu0
      %v459 = vadd.f32 %v317, %v458
      %v460 = vpop.f32.mrb[0].mxu0
      %461 = vmatprep.mubr.f32.mxu0 0.0
      %462 = vmatmul.mubr.f32.gmra.mrb[0].mxu0 %v338
      %v463 = vpop.f32.mrb[0].mxu0
      %v464 = vadd.f32 %v317, %v463
      %v465 = vpop.f32.mrb[0].mxu0
      %466 = vmatprep.mubr.f32.mxu0 0.0
      %467 = vmatmul.mubr.f32.gmra.mrb[0].mxu0 %v341
      %v468 = vpop.f32.mrb[0].mxu0
      %v469 = vadd.f32 %v317, %v468
      %v470 = vpop.f32.mrb[0].mxu0
      %471 = vmatprep.mubr.f32.mxu0 0.0
      %472 = vmatmul.mubr.f32.gmra.mrb[0].mxu0 %v344
      %v473 = vpop.f32.mrb[0].mxu0
      %v474 = vadd.f32 %v317, %v473
      %v475 = vpop.f32.mrb[0].mxu0
      %476 = vmatprep.mubr.f32.mxu0 0.0
      %477 = vmatmul.mubr.f32.gmra.mrb[0].mxu0 %v347
      %v478 = vpop.f32.mrb[0].mxu0
      %v479 = vadd.f32 %v317, %v478
      %v480 = vpop.f32.mrb[0].mxu0
      %481 = vmatprep.mubr.f32.mxu0 0.0
      %482 = vmatmul.mubr.f32.gmra.mrb[0].mxu0 %v350
      %v483 = vpop.f32.mrb[0].mxu0
      %v484 = vadd.f32 %v317, %v483
      %v485 = vpop.f32.mrb[0].mxu0
      %486 = vmatprep.mubr.f32.mxu0 0.0
      %487 = vmatmul.mubr.f32.gmra.mrb[0].mxu0 %v353
      %v488 = vpop.f32.mrb[0].mxu0
      %v489 = vadd.f32 %v317, %v488
      %v490 = vpop.f32.mrb[0].mxu0
      %491 = vmatprep.mubr.f32.mxu0 0.0
      %492 = vmatmul.mubr.f32.gmra.mrb[0].mxu0 %v356
      %v493 = vpop.f32.mrb[0].mxu0
      %v494 = vadd.f32 %v317, %v493
      %v495 = vpop.f32.mrb[0].mxu0
      %496 = vmatprep.mubr.f32.mxu0 0.0
      %497 = vmatmul.mubr.f32.gmra.mrb[0].mxu0 %v359
      %v498 = vpop.f32.mrb[0].mxu0
      %v499 = vadd.f32 %v317, %v498
      %v500 = vpop.f32.mrb[0].mxu0
      %501 = vmatprep.mubr.f32.mxu0 0.0
      %502 = vmatmul.mubr.f32.gmra.mrb[0].mxu0 %v362
      %v503 = vpop.f32.mrb[0].mxu0
      %v504 = vadd.f32 %v317, %v503
      %v505 = vpop.f32.mrb[0].mxu0
      %506 = vmatprep.mubr.f32.mxu0 0.0
      %507 = vmatmul.mubr.f32.gmra.mrb[0].mxu0 %v365
      %v508 = vpop.f32.mrb[0].mxu0
      %v509 = vadd.f32 %v317, %v508
      %v510 = vpop.f32.mrb[0].mxu0
      %511 = vdwg.mxu0
      %v512 = vxor.u32 %v434, 2147483648
      %v513 = vxor.u32 %v439, 2147483648
      %v514 = vxor.u32 %v444, 2147483648
      %v515 = vxor.u32 %v449, 2147483648
      %v516 = vxor.u32 %v454, 2147483648
      %v517 = vxor.u32 %v459, 2147483648
      %v518 = vxor.u32 %v464, 2147483648
      %v519 = vxor.u32 %v469, 2147483648
      %v520 = vxor.u32 %v474, 2147483648
      %v521 = vxor.u32 %v479, 2147483648
      %v522 = vxor.u32 %v484, 2147483648
      %v523 = vxor.u32 %v489, 2147483648
      %v524 = vxor.u32 %v494, 2147483648
      %v525 = vxor.u32 %v499, 2147483648
      %v526 = vxor.u32 %v504, 2147483648
      %v527 = vxor.u32 %v509, 2147483648
      %v528 = vmul.f32 %v512, 1.442695
      %v529 = vpow.pop %v528
      %v530 = vmul.f32 %v513, 1.442695
      %v531 = vpow.pop %v530
      %v532 = vmul.f32 %v514, 1.442695
      %v533 = vpow.pop %v532
      %v534 = vmul.f32 %v515, 1.442695
      %v535 = vpow.pop %v534
      %v536 = vmul.f32 %v516, 1.442695
      %v537 = vpow.pop %v536
      %v538 = vmul.f32 %v517, 1.442695
      %v539 = vpow.pop %v538
      %v540 = vmul.f32 %v518, 1.442695
      %v541 = vpow.pop %v540
      %v542 = vmul.f32 %v519, 1.442695
      %v543 = vpow.pop %v542
      %v544 = vmul.f32 %v520, 1.442695
      %v545 = vpow.pop %v544
      %v546 = vmul.f32 %v521, 1.442695
      %v547 = vpow.pop %v546
      %v548 = vmul.f32 %v522, 1.442695
      %v549 = vpow.pop %v548
      %v550 = vmul.f32 %v523, 1.442695
      %v551 = vpow.pop %v550
      %v552 = vmul.f32 %v524, 1.442695
      %v553 = vpow.pop %v552
      %v554 = vmul.f32 %v525, 1.442695
      %v555 = vpow.pop %v554
      %v556 = vmul.f32 %v526, 1.442695
      %v557 = vpow.pop %v556
      %v558 = vmul.f32 %v527, 1.442695
      %v559 = vpow.pop %v558
      %v560 = vadd.f32 %v529, 1.0
      %v561 = vadd.f32 %v531, 1.0
      %v562 = vadd.f32 %v533, 1.0
      %v563 = vadd.f32 %v535, 1.0
      %v564 = vadd.f32 %v537, 1.0
      %v565 = vadd.f32 %v539, 1.0
      %v566 = vadd.f32 %v541, 1.0
      %v567 = vadd.f32 %v543, 1.0
      %v568 = vadd.f32 %v545, 1.0
      %v569 = vadd.f32 %v547, 1.0
      %v570 = vadd.f32 %v549, 1.0
      %v571 = vadd.f32 %v551, 1.0
      %v572 = vadd.f32 %v553, 1.0
      %v573 = vadd.f32 %v555, 1.0
      %v574 = vadd.f32 %v557, 1.0
      %v575 = vadd.f32 %v559, 1.0
      %v576 = vrcp.pop %v560
      %v577 = vmul.f32 1.0, %v576
      %v578 = vrcp.pop %v561
      %v579 = vmul.f32 1.0, %v578
      %v580 = vrcp.pop %v562
      %v581 = vmul.f32 1.0, %v580
      %v582 = vrcp.pop %v563
      %v583 = vmul.f32 1.0, %v582
      %v584 = vrcp.pop %v564
      %v585 = vmul.f32 1.0, %v584
      %v586 = vrcp.pop %v565
      %v587 = vmul.f32 1.0, %v586
      %v588 = vrcp.pop %v566
      %v589 = vmul.f32 1.0, %v588
      %v590 = vrcp.pop %v567
      %v591 = vmul.f32 1.0, %v590
      %v592 = vrcp.pop %v568
      %v593 = vmul.f32 1.0, %v592
      %v594 = vrcp.pop %v569
      %v595 = vmul.f32 1.0, %v594
      %v596 = vrcp.pop %v570
      %v597 = vmul.f32 1.0, %v596
      %v598 = vrcp.pop %v571
      %v599 = vmul.f32 1.0, %v598
      %v600 = vrcp.pop %v572
      %v601 = vmul.f32 1.0, %v600
      %v602 = vrcp.pop %v573
      %v603 = vmul.f32 1.0, %v602
      %v604 = vrcp.pop %v574
      %v605 = vmul.f32 1.0, %v604
      %v606 = vrcp.pop %v575
      %v607 = vmul.f32 1.0, %v606
      %v608 = vld [vmem:[%s4] sm:$0xff]
      %v609 = vld [vmem:[%s4 + $0x8] sm:$0xff]
      %v610 = vld [vmem:[%s4 + $0x10] sm:$0xff]
      %v611 = vld [vmem:[%s4 + $0x18] sm:$0xff]
      %v612 = vld [vmem:[%s5] sm:$0x1]
      %v614 = vlaneseq
      %v615 = vshrl.u32 %v614, 7
      %v616 = vsub.s32 0, %v615
      %v617 = vrot.slane %v612, %v616
      %v620 = vsel %vm272, %v577, 0
      %v623 = vsel %vm272, %v579, 0
      %v626 = vsel %vm272, %v581, 0
      %v629 = vsel %vm272, %v583, 0
      %v632 = vsel %vm272, %v585, 0
      %v635 = vsel %vm272, %v587, 0
      %v638 = vsel %vm272, %v589, 0
      %v641 = vsel %vm272, %v591, 0
      %v644 = vsel %vm272, %v593, 0
      %v647 = vsel %vm272, %v595, 0
      %v650 = vsel %vm272, %v597, 0
      %v653 = vsel %vm272, %v599, 0
      %v656 = vsel %vm272, %v601, 0
      %v659 = vsel %vm272, %v603, 0
      %v662 = vsel %vm272, %v605, 0
      %v665 = vsel %vm272, %v607, 0
      %667 = vmatprep.subr.mxu0 0.0
      %668 = vmatpush1.msra.mxu0 %v608
      %669 = vmatprep.subr.mxu0 0.0
      %670 = vmatpush1.msra.mxu0 %v609
      %671 = vmatprep.subr.mxu0 0.0
      %672 = vmatpush1.msra.mxu0 %v610
      %673 = vmatprep.subr.mxu0 0.0
      %674 = vmatpush1.msra.mxu0 %v611
      %675 = vmatprep.subr.mxu0 0.0
      %676 = vmatpush1.msra.mxu0 0.0
      %677 = vmatprep.subr.mxu0 0.0
      %678 = vmatpush1.msra.mxu0 0.0
      %679 = vmatprep.subr.mxu0 0.0
      %680 = vmatpush1.msra.mxu0 0.0
      %681 = vmatprep.subr.mxu0 0.0
      %682 = vmatpush1.msra.mxu0 0.0
      %683 = vmatprep.subr.mxu0 0.0
      %684 = vmatpush1.msra.mxu0 0.0
      %685 = vmatprep.subr.mxu0 0.0
      %686 = vmatpush1.msra.mxu0 0.0
      %687 = vmatprep.subr.mxu0 0.0
      %688 = vmatpush1.msra.mxu0 0.0
      %689 = vmatprep.subr.mxu0 0.0
      %690 = vmatpush1.msra.mxu0 0.0
      %691 = vmatprep.subr.mxu0 0.0
      %692 = vmatpush1.msra.mxu0 0.0
      %693 = vmatprep.subr.mxu0 0.0
      %694 = vmatpush1.msra.mxu0 0.0
      %695 = vmatprep.subr.mxu0 0.0
      %696 = vmatpush1.msra.mxu0 0.0
      %697 = vmatprep.subr.mxu0 0.0
      %698 = vmatpush1.msra.mxu0 0.0
      %699 = vmatprep.subr.mxu0 0.0
      %700 = vmatpush1.msra.mxu0 0.0
      %701 = vmatprep.subr.mxu0 0.0
      %702 = vmatpush1.msra.mxu0 0.0
      %703 = vmatprep.subr.mxu0 0.0
      %704 = vmatpush1.msra.mxu0 0.0
      %705 = vmatprep.subr.mxu0 0.0
      %706 = vmatpush1.msra.mxu0 0.0
      %707 = vmatprep.subr.mxu0 0.0
      %708 = vmatpush1.msra.mxu0 0.0
      %709 = vmatprep.subr.mxu0 0.0
      %710 = vmatpush1.msra.mxu0 0.0
      %711 = vmatprep.subr.mxu0 0.0
      %712 = vmatpush1.msra.mxu0 0.0
      %713 = vmatprep.subr.mxu0 0.0
      %714 = vmatpush1.msra.mxu0 0.0
      %715 = vmatprep.subr.mxu0 0.0
      %716 = vmatpush1.msra.mxu0 0.0
      %717 = vmatprep.subr.mxu0 0.0
      %718 = vmatpush1.msra.mxu0 0.0
      %719 = vmatprep.subr.mxu0 0.0
      %720 = vmatpush1.msra.mxu0 0.0
      %721 = vmatprep.subr.mxu0 0.0
      %722 = vmatpush1.msra.mxu0 0.0
      %723 = vmatprep.subr.mxu0 0.0
      %724 = vmatpush1.msra.mxu0 0.0
      %725 = vmatprep.subr.mxu0 0.0
      %726 = vmatpush1.msra.mxu0 0.0
      %727 = vmatprep.subr.mxu0 0.0
      %728 = vmatpush1.msra.mxu0 0.0
      %729 = vmatprep.subr.mxu0 0.0
      %730 = vmatpush1.msra.mxu0 0.0
      %731 = vmatprep.mubr.f32.mxu0 0.0
      %732 = vmatmul.mubr.f32.gmra.mrb[0].mxu0 %v620
      %v733 = vpop.f32.mrb[0].mxu0
      %v734 = vadd.f32 %v617, %v733
      %v735 = vpop.f32.mrb[0].mxu0
      %736 = vmatprep.mubr.f32.mxu0 0.0
      %737 = vmatmul.mubr.f32.gmra.mrb[0].mxu0 %v623
      %v738 = vpop.f32.mrb[0].mxu0
      %v739 = vadd.f32 %v617, %v738
      %v740 = vpop.f32.mrb[0].mxu0
      %741 = vmatprep.mubr.f32.mxu0 0.0
      %742 = vmatmul.mubr.f32.gmra.mrb[0].mxu0 %v626
      %v743 = vpop.f32.mrb[0].mxu0
      %v744 = vadd.f32 %v617, %v743
      %v745 = vpop.f32.mrb[0].mxu0
      %746 = vmatprep.mubr.f32.mxu0 0.0
      %747 = vmatmul.mubr.f32.gmra.mrb[0].mxu0 %v629
      %v748 = vpop.f32.mrb[0].mxu0
      %v749 = vadd.f32 %v617, %v748
      %v750 = vpop.f32.mrb[0].mxu0
      %751 = vmatprep.mubr.f32.mxu0 0.0
      %752 = vmatmul.mubr.f32.gmra.mrb[0].mxu0 %v632
      %v753 = vpop.f32.mrb[0].mxu0
      %v754 = vadd.f32 %v617, %v753
      %v755 = vpop.f32.mrb[0].mxu0
      %756 = vmatprep.mubr.f32.mxu0 0.0
      %757 = vmatmul.mubr.f32.gmra.mrb[0].mxu0 %v635
      %v758 = vpop.f32.mrb[0].mxu0
      %v759 = vadd.f32 %v617, %v758
      %v760 = vpop.f32.mrb[0].mxu0
      %761 = vmatprep.mubr.f32.mxu0 0.0
      %762 = vmatmul.mubr.f32.gmra.mrb[0].mxu0 %v638
      %v763 = vpop.f32.mrb[0].mxu0
      %v764 = vadd.f32 %v617, %v763
      %v765 = vpop.f32.mrb[0].mxu0
      %766 = vmatprep.mubr.f32.mxu0 0.0
      %767 = vmatmul.mubr.f32.gmra.mrb[0].mxu0 %v641
      %v768 = vpop.f32.mrb[0].mxu0
      %v769 = vadd.f32 %v617, %v768
      %v770 = vpop.f32.mrb[0].mxu0
      %771 = vmatprep.mubr.f32.mxu0 0.0
      %772 = vmatmul.mubr.f32.gmra.mrb[0].mxu0 %v644
      %v773 = vpop.f32.mrb[0].mxu0
      %v774 = vadd.f32 %v617, %v773
      %v775 = vpop.f32.mrb[0].mxu0
      %776 = vmatprep.mubr.f32.mxu0 0.0
      %777 = vmatmul.mubr.f32.gmra.mrb[0].mxu0 %v647
      %v778 = vpop.f32.mrb[0].mxu0
      %v779 = vadd.f32 %v617, %v778
      %v780 = vpop.f32.mrb[0].mxu0
      %781 = vmatprep.mubr.f32.mxu0 0.0
      %782 = vmatmul.mubr.f32.gmra.mrb[0].mxu0 %v650
      %v783 = vpop.f32.mrb[0].mxu0
      %v784 = vadd.f32 %v617, %v783
      %v785 = vpop.f32.mrb[0].mxu0
      %786 = vmatprep.mubr.f32.mxu0 0.0
      %787 = vmatmul.mubr.f32.gmra.mrb[0].mxu0 %v653
      %v788 = vpop.f32.mrb[0].mxu0
      %v789 = vadd.f32 %v617, %v788
      %v790 = vpop.f32.mrb[0].mxu0
      %791 = vmatprep.mubr.f32.mxu0 0.0
      %792 = vmatmul.mubr.f32.gmra.mrb[0].mxu0 %v656
      %v793 = vpop.f32.mrb[0].mxu0
      %v794 = vadd.f32 %v617, %v793
      %v795 = vpop.f32.mrb[0].mxu0
      %796 = vmatprep.mubr.f32.mxu0 0.0
      %797 = vmatmul.mubr.f32.gmra.mrb[0].mxu0 %v659
      %v798 = vpop.f32.mrb[0].mxu0
      %v799 = vadd.f32 %v617, %v798
      %v800 = vpop.f32.mrb[0].mxu0
      %801 = vmatprep.mubr.f32.mxu0 0.0
      %802 = vmatmul.mubr.f32.gmra.mrb[0].mxu0 %v662
      %v803 = vpop.f32.mrb[0].mxu0
      %v804 = vadd.f32 %v617, %v803
      %v805 = vpop.f32.mrb[0].mxu0
      %806 = vmatprep.mubr.f32.mxu0 0.0
      %807 = vmatmul.mubr.f32.gmra.mrb[0].mxu0 %v665
      %v808 = vpop.f32.mrb[0].mxu0
      %v809 = vadd.f32 %v617, %v808
      %v810 = vpop.f32.mrb[0].mxu0
      %811 = vdwg.mxu0
      %812 = vmax.xlane.f32.xlu0 %v734
      %v813 = vpop.xlane.xlu0 %812
      %814 = vmax.xlane.f32.xlu0 %v739
      %v815 = vpop.xlane.xlu0 %814
      %816 = vmax.xlane.f32.xlu0 %v744
      %v817 = vpop.xlane.xlu0 %816
      %818 = vmax.xlane.f32.xlu0 %v749
      %v819 = vpop.xlane.xlu0 %818
      %820 = vmax.xlane.f32.xlu0 %v754
      %v821 = vpop.xlane.xlu0 %820
      %822 = vmax.xlane.f32.xlu0 %v759
      %v823 = vpop.xlane.xlu0 %822
      %824 = vmax.xlane.f32.xlu0 %v764
      %v825 = vpop.xlane.xlu0 %824
      %826 = vmax.xlane.f32.xlu0 %v769
      %v827 = vpop.xlane.xlu0 %826
      %828 = vmax.xlane.f32.xlu0 %v774
      %v829 = vpop.xlane.xlu0 %828
      %830 = vmax.xlane.f32.xlu0 %v779
      %v831 = vpop.xlane.xlu0 %830
      %832 = vmax.xlane.f32.xlu0 %v784
      %v833 = vpop.xlane.xlu0 %832
      %834 = vmax.xlane.f32.xlu0 %v789
      %v835 = vpop.xlane.xlu0 %834
      %836 = vmax.xlane.f32.xlu0 %v794
      %v837 = vpop.xlane.xlu0 %836
      %838 = vmax.xlane.f32.xlu0 %v799
      %v839 = vpop.xlane.xlu0 %838
      %840 = vmax.xlane.f32.xlu0 %v804
      %v841 = vpop.xlane.xlu0 %840
      %842 = vmax.xlane.f32.xlu0 %v809
      %v843 = vpop.xlane.xlu0 %842
      %v844 = vsub.f32 %v734, %v813
      %v845 = vsub.f32 %v739, %v815
      %v846 = vsub.f32 %v744, %v817
      %v847 = vsub.f32 %v749, %v819
      %v848 = vsub.f32 %v754, %v821
      %v849 = vsub.f32 %v759, %v823
      %v850 = vsub.f32 %v764, %v825
      %v851 = vsub.f32 %v769, %v827
      %v852 = vsub.f32 %v774, %v829
      %v853 = vsub.f32 %v779, %v831
      %v854 = vsub.f32 %v784, %v833
      %v855 = vsub.f32 %v789, %v835
      %v856 = vsub.f32 %v794, %v837
      %v857 = vsub.f32 %v799, %v839
      %v858 = vsub.f32 %v804, %v841
      %v859 = vsub.f32 %v809, %v843
      %v860 = vmul.f32 %v844, 1.442695
      %v861 = vpow.pop %v860
      %v862 = vmul.f32 %v845, 1.442695
      %v863 = vpow.pop %v862
      %v864 = vmul.f32 %v846, 1.442695
      %v865 = vpow.pop %v864
      %v866 = vmul.f32 %v847, 1.442695
      %v867 = vpow.pop %v866
      %v868 = vmul.f32 %v848, 1.442695
      %v869 = vpow.pop %v868
      %v870 = vmul.f32 %v849, 1.442695
      %v871 = vpow.pop %v870
      %v872 = vmul.f32 %v850, 1.442695
      %v873 = vpow.pop %v872
      %v874 = vmul.f32 %v851, 1.442695
      %v875 = vpow.pop %v874
      %v876 = vmul.f32 %v852, 1.442695
      %v877 = vpow.pop %v876
      %v878 = vmul.f32 %v853, 1.442695
      %v879 = vpow.pop %v878
      %v880 = vmul.f32 %v854, 1.442695
      %v881 = vpow.pop %v880
      %v882 = vmul.f32 %v855, 1.442695
      %v883 = vpow.pop %v882
      %v884 = vmul.f32 %v856, 1.442695
      %v885 = vpow.pop %v884
      %v886 = vmul.f32 %v857, 1.442695
      %v887 = vpow.pop %v886
      %v888 = vmul.f32 %v858, 1.442695
      %v889 = vpow.pop %v888
      %v890 = vmul.f32 %v859, 1.442695
      %v891 = vpow.pop %v890
      %892 = vadd.xlane.f32.xlu0 %v861
      %v893 = vpop.xlane.xlu0 %892
      %894 = vadd.xlane.f32.xlu0 %v863
      %v895 = vpop.xlane.xlu0 %894
      %896 = vadd.xlane.f32.xlu0 %v865
      %v897 = vpop.xlane.xlu0 %896
      %898 = vadd.xlane.f32.xlu0 %v867
      %v899 = vpop.xlane.xlu0 %898
      %900 = vadd.xlane.f32.xlu0 %v869
      %v901 = vpop.xlane.xlu0 %900
      %902 = vadd.xlane.f32.xlu0 %v871
      %v903 = vpop.xlane.xlu0 %902
      %904 = vadd.xlane.f32.xlu0 %v873
      %v905 = vpop.xlane.xlu0 %904
      %906 = vadd.xlane.f32.xlu0 %v875
      %v907 = vpop.xlane.xlu0 %906
      %908 = vadd.xlane.f32.xlu0 %v877
      %v909 = vpop.xlane.xlu0 %908
      %910 = vadd.xlane.f32.xlu0 %v879
      %v911 = vpop.xlane.xlu0 %910
      %912 = vadd.xlane.f32.xlu0 %v881
      %v913 = vpop.xlane.xlu0 %912
      %914 = vadd.xlane.f32.xlu0 %v883
      %v915 = vpop.xlane.xlu0 %914
      %916 = vadd.xlane.f32.xlu0 %v885
      %v917 = vpop.xlane.xlu0 %916
      %918 = vadd.xlane.f32.xlu0 %v887
      %v919 = vpop.xlane.xlu0 %918
      %920 = vadd.xlane.f32.xlu0 %v889
      %v921 = vpop.xlane.xlu0 %920
      %922 = vadd.xlane.f32.xlu0 %v891
      %v923 = vpop.xlane.xlu0 %922
      %v924 = vrcp.pop %v893
      %v925 = vrcp.pop %v895
      %v926 = vrcp.pop %v897
      %v927 = vrcp.pop %v899
      %v928 = vrcp.pop %v901
      %v929 = vrcp.pop %v903
      %v930 = vrcp.pop %v905
      %v931 = vrcp.pop %v907
      %v932 = vrcp.pop %v909
      %v933 = vrcp.pop %v911
      %v934 = vrcp.pop %v913
      %v935 = vrcp.pop %v915
      %v936 = vrcp.pop %v917
      %v937 = vrcp.pop %v919
      %v938 = vrcp.pop %v921
      %v939 = vrcp.pop %v923
      %v940 = vmul.f32 %v861, %v924
      %v941 = vmul.f32 %v863, %v925
      %v942 = vmul.f32 %v865, %v926
      %v943 = vmul.f32 %v867, %v927
      %v944 = vmul.f32 %v869, %v928
      %v945 = vmul.f32 %v871, %v929
      %v946 = vmul.f32 %v873, %v930
      %v947 = vmul.f32 %v875, %v931
      %v948 = vmul.f32 %v877, %v932
      %v949 = vmul.f32 %v879, %v933
      %v950 = vmul.f32 %v881, %v934
      %v951 = vmul.f32 %v883, %v935
      %v952 = vmul.f32 %v885, %v936
      %v953 = vmul.f32 %v887, %v937
      %v954 = vmul.f32 %v889, %v938
      %v955 = vmul.f32 %v891, %v939
      %956 = vst.msk [vmem:[#allocation3] sm:$0xff] %vm272, %v577
      %957 = vst.msk [vmem:[#allocation3 + $0x8] sm:$0xff] %vm272, %v579
      %958 = vst.msk [vmem:[#allocation3 + $0x10] sm:$0xff] %vm272, %v581
      %959 = vst.msk [vmem:[#allocation3 + $0x18] sm:$0xff] %vm272, %v583
      %960 = vst.msk [vmem:[#allocation3 + $0x20] sm:$0xff] %vm272, %v585
      %961 = vst.msk [vmem:[#allocation3 + $0x28] sm:$0xff] %vm272, %v587
      %962 = vst.msk [vmem:[#allocation3 + $0x30] sm:$0xff] %vm272, %v589
      %963 = vst.msk [vmem:[#allocation3 + $0x38] sm:$0xff] %vm272, %v591
      %964 = vst.msk [vmem:[#allocation3 + $0x40] sm:$0xff] %vm272, %v593
      %965 = vst.msk [vmem:[#allocation3 + $0x48] sm:$0xff] %vm272, %v595
      %966 = vst.msk [vmem:[#allocation3 + $0x50] sm:$0xff] %vm272, %v597
      %967 = vst.msk [vmem:[#allocation3 + $0x58] sm:$0xff] %vm272, %v599
      %968 = vst.msk [vmem:[#allocation3 + $0x60] sm:$0xff] %vm272, %v601
      %969 = vst.msk [vmem:[#allocation3 + $0x68] sm:$0xff] %vm272, %v603
      %970 = vst.msk [vmem:[#allocation3 + $0x70] sm:$0xff] %vm272, %v605
      %971 = vst.msk [vmem:[#allocation3 + $0x78] sm:$0xff] %vm272, %v607
      %972 = vst [vmem:[%s7] sm:$0xff] %v940
      %973 = vst [vmem:[%s7 + $0x8] sm:$0xff] %v941
      %974 = vst [vmem:[%s7 + $0x10] sm:$0xff] %v942
      %975 = vst [vmem:[%s7 + $0x18] sm:$0xff] %v943
      %976 = vst [vmem:[%s7 + $0x20] sm:$0xff] %v944
      %977 = vst [vmem:[%s7 + $0x28] sm:$0xff] %v945
      %978 = vst [vmem:[%s7 + $0x30] sm:$0xff] %v946
      %979 = vst [vmem:[%s7 + $0x38] sm:$0xff] %v947
      %980 = vst [vmem:[%s7 + $0x40] sm:$0xff] %v948
      %981 = vst [vmem:[%s7 + $0x48] sm:$0xff] %v949
      %982 = vst [vmem:[%s7 + $0x50] sm:$0xff] %v950
      %983 = vst [vmem:[%s7 + $0x58] sm:$0xff] %v951
      %984 = vst [vmem:[%s7 + $0x60] sm:$0xff] %v952
      %985 = vst [vmem:[%s7 + $0x68] sm:$0xff] %v953
      %986 = vst [vmem:[%s7 + $0x70] sm:$0xff] %v954
      %987 = vst [vmem:[%s7 + $0x78] sm:$0xff] %v955
    $region33: #{neural_fp.4} parent=1 // pred_fallthru
      _
    // Predicated region
    $region34: #{neural_fp.4} parent=1 // pred_check
      _
    $region35: #{neural_fp.4} parent=1 // pred_check_branch
      %989 = sbr.rel (0) target = $region37
    $region36: #{neural_fp.4} parent=1 // pred_region
      %s991 = ssub.s32 2048, 2048
      %992 = vsyncadd [#allocation4], %s991
      %s993 = sshll.u32 [#allocation3], 4
      %s994 = int_to_ptr.vmem [resolvable:$true] %s993
      %999 = dma.vmem_to_hbm [thread:$0]  %s994, 2048, %s6, [#allocation4], 128, 128, 8
    $region37: #{neural_fp.4} parent=1 // pred_fallthru
      _
    // Predicated region
    $region38: #{neural_fp.4} parent=1 // pred_check
      _
    $region39: #{neural_fp.4} parent=1 // pred_check_branch
      %1001 = sbr.rel (0) target = $region41
    $region40: #{neural_fp.4} parent=1 // pred_region
      _
    $region41: #{neural_fp.4} parent=1 // pred_fallthru
      _
    // Predicated region
    $region42: #{neural_fp.4} parent=1 // pred_check
      _
    $region43: #{neural_fp.4} parent=1 // pred_check_branch
      %1003 = sbr.rel (0) target = $region45
    $region44: #{neural_fp.4} parent=1 // pred_region
      %1004 = dma.done [#allocation4], 2048
    $region45: #{neural_fp.4} parent=1 // pred_fallthru
      _
    // Predicated region
    $region46: #{neural_fp.4} parent=1 // pred_check
      _
    $region47: #{neural_fp.4} parent=1 // pred_check_branch
      %1006 = sbr.rel (0) target = $region49
    $region48: #{neural_fp.4} parent=1 // pred_region
      _
    $region49: #{neural_fp.4} parent=1 // pred_fallthru
      _
    %1007 = vsyncpa [#allocation4], 1

</llo_original>
